<compile_context>
chip_gen: v7x
topology: tpu7x:2x2x1
jax: 0.10.0
libtpu: 0.0.40
codegen_flags: <defaults>
</compile_context>

<pallas_src>
import functools
import math

import numpy as np
import jax
import jax.numpy as jnp
from jax.experimental import pallas as pl
from jax.experimental.pallas import tpu as pltpu


def _round_up(x, m):
    return ((x + m - 1) // m) * m


# ----------------------------------------------------------------------------
# Static tap-table construction (host side, cached per shape/config by jax.jit)
# ----------------------------------------------------------------------------
def _dim_taps(n, k, s, p):
    """1-D transposed-conv decomposition into output-stride phases.

    out[s*j + phase] = sum_{(kk, d) in taps[phase]} x[j + d] * w[kk]

    Returns (n_out, n_j, lo, hi, taps); lo/hi are the zero pads needed so that
    j + d + lo always indexes inside the padded axis of length n + lo + hi.
    """
    n_out = (n - 1) * s - 2 * p + k
    if n_out <= 0:
        raise ValueError("non-positive transposed-conv output size")
    if n_out % s != 0:
        raise NotImplementedError("output size must be divisible by the stride")
    n_j = n_out // s
    taps = []
    lo, hi = 0, 0
    for phase in range(s):
        plist = []
        for kk in range(k):
            num = phase + p - kk
            if num % s != 0:
                continue
            d = num // s
            plist.append((kk, d))
            lo = max(lo, -d)
            hi = max(hi, n_j + d - n)
        taps.append(plist)
    return n_out, n_j, lo, hi, taps


# ----------------------------------------------------------------------------
# Pallas kernel: one (batch, lane-tile) per grid step.  Build the stacked
# shifted-window RHS once in VMEM scratch, then ONE fused MXU matmul covers
# every phase and every tap of this lane tile.
# ----------------------------------------------------------------------------
def _make_convt_kernel(shift_offsets, cin_pad, lane_tile):
    def kernel(x_ref, w_ref, b_ref, o_ref, rhs_ref):
        # x_ref  : (cin_pad, Wt)        halo'd input lane window (static offsets)
        # w_ref  : (M_pad, K_pad)       fused per-phase/per-shift weight slab
        # b_ref  : (M_pad, 1)           bias, tiled per phase
        # o_ref  : (M_pad, lane_tile)   all phases of this output lane tile
        # rhs_ref: (K_pad, lane_tile)   VMEM scratch, stacked shifted windows
        for s, dF in enumerate(shift_offsets):          # static unroll
            rhs_ref[s * cin_pad:(s + 1) * cin_pad, :] = x_ref[:, dF:dF + lane_tile]
        acc = jnp.dot(w_ref[...], rhs_ref[...],
                      preferred_element_type=jnp.float32)
        o_ref[...] = (acc + b_ref[...]).astype(o_ref.dtype)

    return kernel


@functools.partial(
    jax.jit,
    static_argnames=("kernel_size", "stride", "padding", "output_padding",
                     "lane_tile"))
def conv_transpose3d_pallas(x, weight, bias, *, kernel_size, stride, padding,
                            output_padding=(0, 0, 0), lane_tile=None):
    """ConvTranspose3d (NCDHW, groups=1, bias) via a Pallas TPU kernel."""
    if any(op != 0 for op in output_padding):
        # TODO(synk): output_padding != 0 is never used by CylindricalConvTrans
        # defaults; supporting it needs per-dim extra right padding of the output.
        raise NotImplementedError("output_padding != 0 is not supported")

    B, cin, Dz, Ph, Rr = x.shape
    cin_w, cout, kz, kh, kw = weight.shape
    assert cin_w == cin and (kz, kh, kw) == tuple(kernel_size)
    s_z, s_p, s_r = stride

    _, njz, loz, hiz, tz = _dim_taps(Dz, kz, s_z, padding[0])
    _, njp, lop, hip, tp = _dim_taps(Ph, kh, s_p, padding[1])
    _, njr, lor, hir, tr = _dim_taps(Rr, kw, s_r, padding[2])

    Zp, Pp, Rp = Dz + loz + hiz, Ph + lop + hip, Rr + lor + hir
    S_p_ = Rp
    S_z_ = Pp * Rp
    L = Zp * S_z_
    Lc = (njz - 1) * S_z_ + (njp - 1) * S_p_ + njr   # last valid flat index + 1
    nF = s_z * s_p * s_r

    # ---- static tap tables: distinct flat shifts + per-(phase, shift) taps ----
    shift_idx, shift_offsets, phase_taps = {}, [], []
    for tz_l in tz:
        for tp_l in tp:
            for tr_l in tr:
                taps = []
                for (kkz, dz) in tz_l:
                    for (kkh, dp) in tp_l:
                        for (kkw, dr) in tr_l:
                            dF = ((dz + loz) * S_z_ + (dp + lop) * S_p_
                                  + (dr + lor))
                            if dF not in shift_idx:
                                shift_idx[dF] = len(shift_offsets)
                                shift_offsets.append(dF)
                            taps.append((kkz, kkh, kkw, shift_idx[dF]))
                phase_taps.append(taps)
    n_shift = len(shift_offsets)
    dF_max = max(shift_offsets)

    # ---- packed / padded sizes -----------------------------------------------
    cin_pad = _round_up(cin, 8)          # sublane-aligned channel blocks
    K_pad = n_shift * cin_pad            # fused contraction depth
    M = nF * cout                        # phases folded into M
    M_pad = _round_up(M, 8)
    out_dtype = x.dtype                  # bf16 in => bf16 out (halves writeback)

    # ---- per-generation VMEM budget and lane-tile selection -------------------
    try:
        vmem_cap = int(pltpu.get_tpu_info().vmem_capacity_bytes)
    except Exception:                    # pragma: no cover - conservative default
        vmem_cap = 64 * 1024 * 1024      # v7x per-TensorCore VMEM
    vmem_limit = min(vmem_cap * 3 // 4, 100 * 1024 * 1024)
    budget = int(vmem_limit * 0.7)

    def _vmem_est(lt):
        wt = _round_up(lt + dF_max, 128)
        return 4 * (2 * cin_pad * wt            # double-buffered input window
                    + 2 * M_pad * lt            # double-buffered output tile
                    + K_pad * lt                # stacked-RHS scratch
                    + 2 * (M_pad * K_pad + M_pad)) + (1 << 20)

    lc_pad = _round_up(Lc, 128)
    if lane_tile is not None:
        Lt = min(_round_up(int(lane_tile), 128), lc_pad)
    else:
        Lt = 128
        for cand in (4096, 2048, 1024, 512, 256, 128):
            c = min(cand, lc_pad)
            if _vmem_est(c) <= budget:
                Lt = c
                break
    vmem_limit = int(min(max(vmem_limit, _vmem_est(Lt) * 1.25),
                         vmem_cap * 0.9))

    n_t = -(-Lc // Lt)                   # lane tiles per batch
    LT = n_t * Lt                        # stored lanes (<< L in general)
    Wt = _round_up(Lt + dF_max, 128)     # halo'd input window width

    # ---- wrapper-side input packing: zero pad, flatten, overlapping windows ---
    xp = jnp.pad(x, ((0, 0), (0, cin_pad - cin),
                     (loz, hiz), (lop, hip), (lor, hir)))
    x_flat = xp.reshape(B, cin_pad, L)
    Lsrc = (n_t - 1) * Lt + Wt
    if Lsrc > L:
        x_flat = jnp.pad(x_flat, ((0, 0), (0, 0), (0, Lsrc - L)))
    elif Lsrc < L:
        x_flat = x_flat[:, :, :Lsrc]
    # overlapping lane windows with halo => all in-kernel offsets are static
    x_tiles = jnp.stack(
        [jax.lax.slice_in_dim(x_flat, t * Lt, t * Lt + Wt, axis=2)
         for t in range(n_t)], axis=1)                 # (B, n_t, cin_pad, Wt)

    # ---- wrapper-side weight packing: fused (M_pad, K_pad) slab ---------------
    sel = np.zeros((nF, n_shift, kz, kh, kw), dtype=np.float32)
    for f, taps in enumerate(phase_taps):
        for (kkz, kkh, kkw, s) in taps:
            sel[f, s, kkz, kkh, kkw] = 1.0
    sel = jnp.asarray(sel, dtype=weight.dtype)
    # weight layout (cin, cout, kz, kh, kw) -> blocks[f, cout, shift, cin]
    w_blocks = jnp.einsum('fsxyz,ioxyz->fosi', sel, weight)
    w_blocks = jnp.pad(w_blocks, ((0, 0), (0, 0), (0, 0), (0, cin_pad - cin)))
    w_slab = w_blocks.reshape(M, K_pad)
    w_slab = jnp.pad(w_slab, ((0, M_pad - M), (0, 0)))
    b_slab = jnp.pad(jnp.tile(bias, nF), (0, M_pad - M)).reshape(M_pad, 1)

    kernel = _make_convt_kernel(tuple(shift_offsets), cin_pad, Lt)

    out_flat = pl.pallas_call(
        kernel,
        out_shape=jax.ShapeDtypeStruct((B, M_pad, LT), out_dtype),
        grid_spec=pltpu.PrefetchScalarGridSpec(
            num_scalar_prefetch=0,
            grid=(B, n_t),
            in_specs=[
                pl.BlockSpec((None, None, cin_pad, Wt), lambda b, t: (b, t, 0, 0)),
                pl.BlockSpec((M_pad, K_pad), lambda b, t: (0, 0)),
                pl.BlockSpec((M_pad, 1), lambda b, t: (0, 0)),
            ],
            out_specs=pl.BlockSpec((None, M_pad, Lt), lambda b, t: (b, 0, t)),
            scratch_shapes=[pltpu.VMEM((K_pad, Lt), x.dtype)],
        ),
        compiler_params=pltpu.CompilerParams(
            dimension_semantics=("parallel", "parallel"),  # megacore split
            vmem_limit_bytes=vmem_limit,
        ),
    )(x_tiles, w_slab, b_slab)

    # ---- wrapper-side layout plumbing: crop pads, interleave phases -----------
    out_flat = out_flat[:, :M, :]
    if LT >= L:
        out_flat = out_flat[:, :, :L]
    else:
        # the padded region only covers positions that get cropped below
        out_flat = jnp.pad(out_flat, ((0, 0), (0, 0), (0, L - LT)))
    y = out_flat.reshape(B, s_z, s_p, s_r, cout, Zp, Pp, Rp)
    y = y[..., :njz, :njp, :njr]
    y = jnp.transpose(y, (0, 4, 5, 1, 6, 2, 7, 3))
    return y.reshape(B, cout, njz * s_z, njp * s_p, njr * s_r)


# ----------------------------------------------------------------------------
# Module wrapper mirroring the PyTorch CylindricalConvTrans (forward only)
# ----------------------------------------------------------------------------
class CylindricalConvTrans:
    """Cylindrical 3D transposed convolution (circular padding on phi)."""

    def __init__(self, dim_in, dim_out, kernel_size=(3, 4, 4), stride=(1, 2, 2),
                 groups=1, padding=1, output_padding=0, *, key=None,
                 dtype=jnp.float32, lane_tile=None):
        # NOTE: the original module accepts `groups` but never forwards it to
        # nn.ConvTranspose3d, so groups is effectively always 1; we mirror that.
        del groups
        if isinstance(padding, int):
            padding = [padding] * 3
        self.padding_orig = tuple(int(p) for p in padding)
        conv_padding = list(self.padding_orig)
        conv_padding[1] = kernel_size[1] - 1
        self.conv_padding = tuple(conv_padding)
        self.kernel_size = tuple(int(k) for k in kernel_size)
        self.stride = tuple(int(s) for s in stride)
        if isinstance(output_padding, int):
            output_padding = (output_padding,) * 3
        self.output_padding = tuple(int(p) for p in output_padding)
        self.dim_in = int(dim_in)
        self.dim_out = int(dim_out)
        self.lane_tile = lane_tile

        if key is None:
            key = jax.random.PRNGKey(0)
        k_w, k_b = jax.random.split(key)
        # PyTorch-style ConvTranspose init: U(-1/sqrt(fan), 1/sqrt(fan))
        fan = self.dim_out * int(np.prod(self.kernel_size))
        bound = 1.0 / math.sqrt(fan)
        # PyTorch ConvTranspose3d weight layout: (C_in, C_out, k_z, k_phi, k_r)
        self.weight = jax.random.uniform(
            k_w, (self.dim_in, self.dim_out) + self.kernel_size,
            minval=-bound, maxval=bound, dtype=dtype)
        self.bias = jax.random.uniform(
            k_b, (self.dim_out,), minval=-bound, maxval=bound, dtype=dtype)

    def __call__(self, x):
        return self.forward(x)

    def forward(self, x):
        circ = self.padding_orig[1]
        if circ > 0:
            x = jnp.concatenate(
                [x[:, :, :, -circ:, :], x, x[:, :, :, :circ, :]], axis=3)
        return conv_transpose3d_pallas(
            x, self.weight, self.bias,
            kernel_size=self.kernel_size, stride=self.stride,
            padding=self.conv_padding, output_padding=self.output_padding,
            lane_tile=self.lane_tile)


# ----------------------------------------------------------------------------
# Pure-numpy reference (float64) for the self-check
# ----------------------------------------------------------------------------
def _ref_conv_transpose3d(x, w, b, kernel, stride, padding):
    B, cin, D, H, Wd = x.shape
    _, cout, kd, khh, kww = w.shape
    sd, sh, sw = stride
    pd, ph, pw = padding
    Dfull = (D - 1) * sd + kd
    Hfull = (H - 1) * sh + khh
    Wfull = (Wd - 1) * sw + kww
    out = np.zeros((B, cout, Dfull, Hfull, Wfull), dtype=np.float64)
    for z in range(kd):
        for y in range(khh):
            for r in range(kww):
                contrib = np.einsum('bcijl,cd->bdijl', x, w[:, :, z, y, r])
                out[:, :,
                    z:z + (D - 1) * sd + 1:sd,
                    y:y + (H - 1) * sh + 1:sh,
                    r:r + (Wd - 1) * sw + 1:sw] += contrib
    out = out[:, :, pd:Dfull - pd, ph:Hfull - ph, pw:Wfull - pw]
    return out + b.reshape(1, -1, 1, 1, 1)


def _ref_cylindrical_conv_trans(x, weight, bias, kernel_size, stride, padding_orig):
    x = np.asarray(x, dtype=np.float64)
    w = np.asarray(weight, dtype=np.float64)
    b = np.asarray(bias, dtype=np.float64)
    circ = padding_orig[1]
    if circ > 0:
        x = np.concatenate([x[:, :, :, -circ:, :], x, x[:, :, :, :circ, :]], axis=3)
    conv_pad = list(padding_orig)
    conv_pad[1] = kernel_size[1] - 1
    return _ref_conv_transpose3d(x, w, b, kernel_size, stride, tuple(conv_pad))


# ----------------------------------------------------------------------------
# Demo / self-check
# ----------------------------------------------------------------------------
if __name__ == "__main__":
    key = jax.random.PRNGKey(0)
    k_x, k_mod = jax.random.split(key)

    B, C_in, C_out = 2, 4, 8
    Z, PHI, RAD = 6, 8, 9                       # (z_bin, phi_bin, r_bin)

    x = jax.random.normal(k_x, (B, C_in, Z, PHI, RAD), dtype=jnp.float32)
    # Round inputs/params to bf16-representable f32 so the MXU result matches
    # the float64 numpy reference to float32 accumulation rounding.
    x = x.astype(jnp.bfloat16).astype(jnp.float32)

    layer = CylindricalConvTrans(C_in, C_out, key=k_mod)
    layer.weight = layer.weight.astype(jnp.bfloat16).astype(jnp.float32)
    layer.bias = layer.bias.astype(jnp.bfloat16).astype(jnp.float32)

    ref = _ref_cylindrical_conv_trans(
        np.asarray(x), np.asarray(layer.weight), np.asarray(layer.bias),
        layer.kernel_size, layer.stride, layer.padding_orig)

    # 1) default (auto lane-tile; single tile at this size)
    y = jax.block_until_ready(layer(x))
    assert y.shape == ref.shape, (y.shape, ref.shape)
    if not np.allclose(np.asarray(y), ref, rtol=1e-4, atol=1e-4):
        err = float(np.max(np.abs(np.asarray(y) - ref)))
        raise SystemExit(f"mismatch (auto tile) vs ConvTranspose3d ref, max err={err}")

    # 2) force a small lane tile to exercise the multi-tile + halo path
    layer.lane_tile = 256
    y2 = jax.block_until_ready(layer(x))
    assert y2.shape == ref.shape, (y2.shape, ref.shape)
    if not np.allclose(np.asarray(y2), ref, rtol=1e-4, atol=1e-4):
        err = float(np.max(np.abs(np.asarray(y2) - ref)))
        raise SystemExit(f"mismatch (lane_tile=256) vs ConvTranspose3d ref, max err={err}")

    print("KERNEL_OK")
</pallas_src>

<mosaic_0001>
module attributes {stable_mosaic.version = 11 : i64} {
  func.func @kernel(%arg0: i32, %arg1: i32, %arg2: memref<1x1x8x896xf32, #tpu.memory_space<vmem>>, %arg3: memref<32x216xf32, #tpu.memory_space<vmem>>, %arg4: memref<32x1xf32, #tpu.memory_space<vmem>>, %arg5: memref<1x32x640xf32, #tpu.memory_space<vmem>>, %arg6: memref<216x640xf32, #tpu.memory_space<vmem>>) attributes {dimension_semantics = [#tpu.dimension_semantics<parallel>, #tpu.dimension_semantics<parallel>], iteration_bounds = array<i64: 2, 1>, scalar_prefetch = 0 : i64, scratch_operands = 1 : i64, tpu.core_type = #tpu.core_type<tc>, window_params = [{transform_indices = @transform_0, window_bounds = array<i64: 1, 1, 8, 896>}, {pipeline_mode = #tpu.pipeline_mode<synchronous>, transform_indices = @transform_1, window_bounds = array<i64: 32, 216>}, {pipeline_mode = #tpu.pipeline_mode<synchronous>, transform_indices = @transform_2, window_bounds = array<i64: 32, 1>}, {transform_indices = @transform_3, window_bounds = array<i64: 1, 32, 640>}]} {
    %c0 = arith.constant 0 : index
    %c0_0 = arith.constant 0 : index
    %c0_1 = arith.constant 0 : index
    %c232 = arith.constant 232 : index
    %0 = vector.load %arg2[%c0, %c0_0, %c0_1, %c232] : memref<1x1x8x896xf32, #tpu.memory_space<vmem>>, vector<1x1x8x640xf32>
    %1 = vector.shape_cast %0 : vector<1x1x8x640xf32> to vector<8x640xf32>
    %c0_2 = arith.constant 0 : index
    %c0_3 = arith.constant 0 : index
    %2 = vector.load %arg6[%c0_2, %c0_3] : memref<216x640xf32, #tpu.memory_space<vmem>>, vector<8x640xf32>
    tpu.vector_store %arg6[%c0_2, %c0_3], %1 {strides = array<i32>} : memref<216x640xf32, #tpu.memory_space<vmem>>, vector<8x640xf32>,
    %c0_4 = arith.constant 0 : index
    %c0_5 = arith.constant 0 : index
    %c0_6 = arith.constant 0 : index
    %c231 = arith.constant 231 : index
    %3 = vector.load %arg2[%c0_4, %c0_5, %c0_6, %c231] : memref<1x1x8x896xf32, #tpu.memory_space<vmem>>, vector<1x1x8x640xf32>
    %4 = vector.shape_cast %3 : vector<1x1x8x640xf32> to vector<8x640xf32>
    %c8 = arith.constant 8 : index
    %c0_7 = arith.constant 0 : index
    %5 = vector.load %arg6[%c8, %c0_7] : memref<216x640xf32, #tpu.memory_space<vmem>>, vector<8x640xf32>
    tpu.vector_store %arg6[%c8, %c0_7], %4 {strides = array<i32>} : memref<216x640xf32, #tpu.memory_space<vmem>>, vector<8x640xf32>,
    %c0_8 = arith.constant 0 : index
    %c0_9 = arith.constant 0 : index
    %c0_10 = arith.constant 0 : index
    %c221 = arith.constant 221 : index
    %6 = vector.load %arg2[%c0_8, %c0_9, %c0_10, %c221] : memref<1x1x8x896xf32, #tpu.memory_space<vmem>>, vector<1x1x8x640xf32>
    %7 = vector.shape_cast %6 : vector<1x1x8x640xf32> to vector<8x640xf32>
    %c16 = arith.constant 16 : index
    %c0_11 = arith.constant 0 : index
    %8 = vector.load %arg6[%c16, %c0_11] : memref<216x640xf32, #tpu.memory_space<vmem>>, vector<8x640xf32>
    tpu.vector_store %arg6[%c16, %c0_11], %7 {strides = array<i32>} : memref<216x640xf32, #tpu.memory_space<vmem>>, vector<8x640xf32>,
    %c0_12 = arith.constant 0 : index
    %c0_13 = arith.constant 0 : index
    %c0_14 = arith.constant 0 : index
    %c220 = arith.constant 220 : index
    %9 = vector.load %arg2[%c0_12, %c0_13, %c0_14, %c220] : memref<1x1x8x896xf32, #tpu.memory_space<vmem>>, vector<1x1x8x640xf32>
    %10 = vector.shape_cast %9 : vector<1x1x8x640xf32> to vector<8x640xf32>
    %c24 = arith.constant 24 : index
    %c0_15 = arith.constant 0 : index
    %11 = vector.load %arg6[%c24, %c0_15] : memref<216x640xf32, #tpu.memory_space<vmem>>, vector<8x640xf32>
    tpu.vector_store %arg6[%c24, %c0_15], %10 {strides = array<i32>} : memref<216x640xf32, #tpu.memory_space<vmem>>, vector<8x640xf32>,
    %c0_16 = arith.constant 0 : index
    %c0_17 = arith.constant 0 : index
    %c0_18 = arith.constant 0 : index
    %c122 = arith.constant 122 : index
    %12 = vector.load %arg2[%c0_16, %c0_17, %c0_18, %c122] : memref<1x1x8x896xf32, #tpu.memory_space<vmem>>, vector<1x1x8x640xf32>
    %13 = vector.shape_cast %12 : vector<1x1x8x640xf32> to vector<8x640xf32>
    %c32 = arith.constant 32 : index
    %c0_19 = arith.constant 0 : index
    %14 = vector.load %arg6[%c32, %c0_19] : memref<216x640xf32, #tpu.memory_space<vmem>>, vector<8x640xf32>
    tpu.vector_store %arg6[%c32, %c0_19], %13 {strides = array<i32>} : memref<216x640xf32, #tpu.memory_space<vmem>>, vector<8x640xf32>,
    %c0_20 = arith.constant 0 : index
    %c0_21 = arith.constant 0 : index
    %c0_22 = arith.constant 0 : index
    %c121 = arith.constant 121 : index
    %15 = vector.load %arg2[%c0_20, %c0_21, %c0_22, %c121] : memref<1x1x8x896xf32, #tpu.memory_space<vmem>>, vector<1x1x8x640xf32>
    %16 = vector.shape_cast %15 : vector<1x1x8x640xf32> to vector<8x640xf32>
    %c40 = arith.constant 40 : index
    %c0_23 = arith.constant 0 : index
    %17 = vector.load %arg6[%c40, %c0_23] : memref<216x640xf32, #tpu.memory_space<vmem>>, vector<8x640xf32>
    tpu.vector_store %arg6[%c40, %c0_23], %16 {strides = array<i32>} : memref<216x640xf32, #tpu.memory_space<vmem>>, vector<8x640xf32>,
    %c0_24 = arith.constant 0 : index
    %c0_25 = arith.constant 0 : index
    %c0_26 = arith.constant 0 : index
    %c111 = arith.constant 111 : index
    %18 = vector.load %arg2[%c0_24, %c0_25, %c0_26, %c111] : memref<1x1x8x896xf32, #tpu.memory_space<vmem>>, vector<1x1x8x640xf32>
    %19 = vector.shape_cast %18 : vector<1x1x8x640xf32> to vector<8x640xf32>
    %c48 = arith.constant 48 : index
    %c0_27 = arith.constant 0 : index
    %20 = vector.load %arg6[%c48, %c0_27] : memref<216x640xf32, #tpu.memory_space<vmem>>, vector<8x640xf32>
    tpu.vector_store %arg6[%c48, %c0_27], %19 {strides = array<i32>} : memref<216x640xf32, #tpu.memory_space<vmem>>, vector<8x640xf32>,
    %c0_28 = arith.constant 0 : index
    %c0_29 = arith.constant 0 : index
    %c0_30 = arith.constant 0 : index
    %c110 = arith.constant 110 : index
    %21 = vector.load %arg2[%c0_28, %c0_29, %c0_30, %c110] : memref<1x1x8x896xf32, #tpu.memory_space<vmem>>, vector<1x1x8x640xf32>
    %22 = vector.shape_cast %21 : vector<1x1x8x640xf32> to vector<8x640xf32>
    %c56 = arith.constant 56 : index
    %c0_31 = arith.constant 0 : index
    %23 = vector.load %arg6[%c56, %c0_31] : memref<216x640xf32, #tpu.memory_space<vmem>>, vector<8x640xf32>
    tpu.vector_store %arg6[%c56, %c0_31], %22 {strides = array<i32>} : memref<216x640xf32, #tpu.memory_space<vmem>>, vector<8x640xf32>,
    %c0_32 = arith.constant 0 : index
    %c0_33 = arith.constant 0 : index
    %c0_34 = arith.constant 0 : index
    %c12 = arith.constant 12 : index
    %24 = vector.load %arg2[%c0_32, %c0_33, %c0_34, %c12] : memref<1x1x8x896xf32, #tpu.memory_space<vmem>>, vector<1x1x8x640xf32>
    %25 = vector.shape_cast %24 : vector<1x1x8x640xf32> to vector<8x640xf32>
    %c64 = arith.constant 64 : index
    %c0_35 = arith.constant 0 : index
    %26 = vector.load %arg6[%c64, %c0_35] : memref<216x640xf32, #tpu.memory_space<vmem>>, vector<8x640xf32>
    tpu.vector_store %arg6[%c64, %c0_35], %25 {strides = array<i32>} : memref<216x640xf32, #tpu.memory_space<vmem>>, vector<8x640xf32>,
    %c0_36 = arith.constant 0 : index
    %c0_37 = arith.constant 0 : index
    %c0_38 = arith.constant 0 : index
    %c11 = arith.constant 11 : index
    %27 = vector.load %arg2[%c0_36, %c0_37, %c0_38, %c11] : memref<1x1x8x896xf32, #tpu.memory_space<vmem>>, vector<1x1x8x640xf32>
    %28 = vector.shape_cast %27 : vector<1x1x8x640xf32> to vector<8x640xf32>
    %c72 = arith.constant 72 : index
    %c0_39 = arith.constant 0 : index
    %29 = vector.load %arg6[%c72, %c0_39] : memref<216x640xf32, #tpu.memory_space<vmem>>, vector<8x640xf32>
    tpu.vector_store %arg6[%c72, %c0_39], %28 {strides = array<i32>} : memref<216x640xf32, #tpu.memory_space<vmem>>, vector<8x640xf32>,
    %c0_40 = arith.constant 0 : index
    %c0_41 = arith.constant 0 : index
    %c0_42 = arith.constant 0 : index
    %c1 = arith.constant 1 : index
    %30 = vector.load %arg2[%c0_40, %c0_41, %c0_42, %c1] : memref<1x1x8x896xf32, #tpu.memory_space<vmem>>, vector<1x1x8x640xf32>
    %31 = vector.shape_cast %30 : vector<1x1x8x640xf32> to vector<8x640xf32>
    %c80 = arith.constant 80 : index
    %c0_43 = arith.constant 0 : index
    %32 = vector.load %arg6[%c80, %c0_43] : memref<216x640xf32, #tpu.memory_space<vmem>>, vector<8x640xf32>
    tpu.vector_store %arg6[%c80, %c0_43], %31 {strides = array<i32>} : memref<216x640xf32, #tpu.memory_space<vmem>>, vector<8x640xf32>,
    %c0_44 = arith.constant 0 : index
    %c0_45 = arith.constant 0 : index
    %c0_46 = arith.constant 0 : index
    %c0_47 = arith.constant 0 : index
    %33 = vector.load %arg2[%c0_44, %c0_45, %c0_46, %c0_47] : memref<1x1x8x896xf32, #tpu.memory_space<vmem>>, vector<1x1x8x640xf32>
    %34 = vector.shape_cast %33 : vector<1x1x8x640xf32> to vector<8x640xf32>
    %c88 = arith.constant 88 : index
    %c0_48 = arith.constant 0 : index
    %35 = vector.load %arg6[%c88, %c0_48] : memref<216x640xf32, #tpu.memory_space<vmem>>, vector<8x640xf32>
    tpu.vector_store %arg6[%c88, %c0_48], %34 {strides = array<i32>} : memref<216x640xf32, #tpu.memory_space<vmem>>, vector<8x640xf32>,
    %c0_49 = arith.constant 0 : index
    %c0_50 = arith.constant 0 : index
    %c0_51 = arith.constant 0 : index
    %c233 = arith.constant 233 : index
    %36 = vector.load %arg2[%c0_49, %c0_50, %c0_51, %c233] : memref<1x1x8x896xf32, #tpu.memory_space<vmem>>, vector<1x1x8x640xf32>
    %37 = vector.shape_cast %36 : vector<1x1x8x640xf32> to vector<8x640xf32>
    %c96 = arith.constant 96 : index
    %c0_52 = arith.constant 0 : index
    %38 = vector.load %arg6[%c96, %c0_52] : memref<216x640xf32, #tpu.memory_space<vmem>>, vector<8x640xf32>
    tpu.vector_store %arg6[%c96, %c0_52], %37 {strides = array<i32>} : memref<216x640xf32, #tpu.memory_space<vmem>>, vector<8x640xf32>,
    %c0_53 = arith.constant 0 : index
    %c0_54 = arith.constant 0 : index
    %c0_55 = arith.constant 0 : index
    %c222 = arith.constant 222 : index
    %39 = vector.load %arg2[%c0_53, %c0_54, %c0_55, %c222] : memref<1x1x8x896xf32, #tpu.memory_space<vmem>>, vector<1x1x8x640xf32>
    %40 = vector.shape_cast %39 : vector<1x1x8x640xf32> to vector<8x640xf32>
    %c104 = arith.constant 104 : index
    %c0_56 = arith.constant 0 : index
    %41 = vector.load %arg6[%c104, %c0_56] : memref<216x640xf32, #tpu.memory_space<vmem>>, vector<8x640xf32>
    tpu.vector_store %arg6[%c104, %c0_56], %40 {strides = array<i32>} : memref<216x640xf32, #tpu.memory_space<vmem>>, vector<8x640xf32>,
    %c0_57 = arith.constant 0 : index
    %c0_58 = arith.constant 0 : index
    %c0_59 = arith.constant 0 : index
    %c123 = arith.constant 123 : index
    %42 = vector.load %arg2[%c0_57, %c0_58, %c0_59, %c123] : memref<1x1x8x896xf32, #tpu.memory_space<vmem>>, vector<1x1x8x640xf32>
    %43 = vector.shape_cast %42 : vector<1x1x8x640xf32> to vector<8x640xf32>
    %c112 = arith.constant 112 : index
    %c0_60 = arith.constant 0 : index
    %44 = vector.load %arg6[%c112, %c0_60] : memref<216x640xf32, #tpu.memory_space<vmem>>, vector<8x640xf32>
    tpu.vector_store %arg6[%c112, %c0_60], %43 {strides = array<i32>} : memref<216x640xf32, #tpu.memory_space<vmem>>, vector<8x640xf32>,
    %c0_61 = arith.constant 0 : index
    %c0_62 = arith.constant 0 : index
    %c0_63 = arith.constant 0 : index
    %c112_64 = arith.constant 112 : index
    %45 = vector.load %arg2[%c0_61, %c0_62, %c0_63, %c112_64] : memref<1x1x8x896xf32, #tpu.memory_space<vmem>>, vector<1x1x8x640xf32>
    %46 = vector.shape_cast %45 : vector<1x1x8x640xf32> to vector<8x640xf32>
    %c120 = arith.constant 120 : index
    %c0_65 = arith.constant 0 : index
    %47 = vector.load %arg6[%c120, %c0_65] : memref<216x640xf32, #tpu.memory_space<vmem>>, vector<8x640xf32>
    tpu.vector_store %arg6[%c120, %c0_65], %46 {strides = array<i32>} : memref<216x640xf32, #tpu.memory_space<vmem>>, vector<8x640xf32>,
    %c0_66 = arith.constant 0 : index
    %c0_67 = arith.constant 0 : index
    %c0_68 = arith.constant 0 : index
    %c13 = arith.constant 13 : index
    %48 = vector.load %arg2[%c0_66, %c0_67, %c0_68, %c13] : memref<1x1x8x896xf32, #tpu.memory_space<vmem>>, vector<1x1x8x640xf32>
    %49 = vector.shape_cast %48 : vector<1x1x8x640xf32> to vector<8x640xf32>
    %c128 = arith.constant 128 : index
    %c0_69 = arith.constant 0 : index
    %50 = vector.load %arg6[%c128, %c0_69] : memref<216x640xf32, #tpu.memory_space<vmem>>, vector<8x640xf32>
    tpu.vector_store %arg6[%c128, %c0_69], %49 {strides = array<i32>} : memref<216x640xf32, #tpu.memory_space<vmem>>, vector<8x640xf32>,
    %c0_70 = arith.constant 0 : index
    %c0_71 = arith.constant 0 : index
    %c0_72 = arith.constant 0 : index
    %c2 = arith.constant 2 : index
    %51 = vector.load %arg2[%c0_70, %c0_71, %c0_72, %c2] : memref<1x1x8x896xf32, #tpu.memory_space<vmem>>, vector<1x1x8x640xf32>
    %52 = vector.shape_cast %51 : vector<1x1x8x640xf32> to vector<8x640xf32>
    %c136 = arith.constant 136 : index
    %c0_73 = arith.constant 0 : index
    %53 = vector.load %arg6[%c136, %c0_73] : memref<216x640xf32, #tpu.memory_space<vmem>>, vector<8x640xf32>
    tpu.vector_store %arg6[%c136, %c0_73], %52 {strides = array<i32>} : memref<216x640xf32, #tpu.memory_space<vmem>>, vector<8x640xf32>,
    %c0_74 = arith.constant 0 : index
    %c0_75 = arith.constant 0 : index
    %c0_76 = arith.constant 0 : index
    %c243 = arith.constant 243 : index
    %54 = vector.load %arg2[%c0_74, %c0_75, %c0_76, %c243] : memref<1x1x8x896xf32, #tpu.memory_space<vmem>>, vector<1x1x8x640xf32>
    %55 = vector.shape_cast %54 : vector<1x1x8x640xf32> to vector<8x640xf32>
    %c144 = arith.constant 144 : index
    %c0_77 = arith.constant 0 : index
    %56 = vector.load %arg6[%c144, %c0_77] : memref<216x640xf32, #tpu.memory_space<vmem>>, vector<8x640xf32>
    tpu.vector_store %arg6[%c144, %c0_77], %55 {strides = array<i32>} : memref<216x640xf32, #tpu.memory_space<vmem>>, vector<8x640xf32>,
    %c0_78 = arith.constant 0 : index
    %c0_79 = arith.constant 0 : index
    %c0_80 = arith.constant 0 : index
    %c242 = arith.constant 242 : index
    %57 = vector.load %arg2[%c0_78, %c0_79, %c0_80, %c242] : memref<1x1x8x896xf32, #tpu.memory_space<vmem>>, vector<1x1x8x640xf32>
    %58 = vector.shape_cast %57 : vector<1x1x8x640xf32> to vector<8x640xf32>
    %c152 = arith.constant 152 : index
    %c0_81 = arith.constant 0 : index
    %59 = vector.load %arg6[%c152, %c0_81] : memref<216x640xf32, #tpu.memory_space<vmem>>, vector<8x640xf32>
    tpu.vector_store %arg6[%c152, %c0_81], %58 {strides = array<i32>} : memref<216x640xf32, #tpu.memory_space<vmem>>, vector<8x640xf32>,
    %c0_82 = arith.constant 0 : index
    %c0_83 = arith.constant 0 : index
    %c0_84 = arith.constant 0 : index
    %c133 = arith.constant 133 : index
    %60 = vector.load %arg2[%c0_82, %c0_83, %c0_84, %c133] : memref<1x1x8x896xf32, #tpu.memory_space<vmem>>, vector<1x1x8x640xf32>
    %61 = vector.shape_cast %60 : vector<1x1x8x640xf32> to vector<8x640xf32>
    %c160 = arith.constant 160 : index
    %c0_85 = arith.constant 0 : index
    %62 = vector.load %arg6[%c160, %c0_85] : memref<216x640xf32, #tpu.memory_space<vmem>>, vector<8x640xf32>
    tpu.vector_store %arg6[%c160, %c0_85], %61 {strides = array<i32>} : memref<216x640xf32, #tpu.memory_space<vmem>>, vector<8x640xf32>,
    %c0_86 = arith.constant 0 : index
    %c0_87 = arith.constant 0 : index
    %c0_88 = arith.constant 0 : index
    %c132 = arith.constant 132 : index
    %63 = vector.load %arg2[%c0_86, %c0_87, %c0_88, %c132] : memref<1x1x8x896xf32, #tpu.memory_space<vmem>>, vector<1x1x8x640xf32>
    %64 = vector.shape_cast %63 : vector<1x1x8x640xf32> to vector<8x640xf32>
    %c168 = arith.constant 168 : index
    %c0_89 = arith.constant 0 : index
    %65 = vector.load %arg6[%c168, %c0_89] : memref<216x640xf32, #tpu.memory_space<vmem>>, vector<8x640xf32>
    tpu.vector_store %arg6[%c168, %c0_89], %64 {strides = array<i32>} : memref<216x640xf32, #tpu.memory_space<vmem>>, vector<8x640xf32>,
    %c0_90 = arith.constant 0 : index
    %c0_91 = arith.constant 0 : index
    %c0_92 = arith.constant 0 : index
    %c23 = arith.constant 23 : index
    %66 = vector.load %arg2[%c0_90, %c0_91, %c0_92, %c23] : memref<1x1x8x896xf32, #tpu.memory_space<vmem>>, vector<1x1x8x640xf32>
    %67 = vector.shape_cast %66 : vector<1x1x8x640xf32> to vector<8x640xf32>
    %c176 = arith.constant 176 : index
    %c0_93 = arith.constant 0 : index
    %68 = vector.load %arg6[%c176, %c0_93] : memref<216x640xf32, #tpu.memory_space<vmem>>, vector<8x640xf32>
    tpu.vector_store %arg6[%c176, %c0_93], %67 {strides = array<i32>} : memref<216x640xf32, #tpu.memory_space<vmem>>, vector<8x640xf32>,
    %c0_94 = arith.constant 0 : index
    %c0_95 = arith.constant 0 : index
    %c0_96 = arith.constant 0 : index
    %c22 = arith.constant 22 : index
    %69 = vector.load %arg2[%c0_94, %c0_95, %c0_96, %c22] : memref<1x1x8x896xf32, #tpu.memory_space<vmem>>, vector<1x1x8x640xf32>
    %70 = vector.shape_cast %69 : vector<1x1x8x640xf32> to vector<8x640xf32>
    %c184 = arith.constant 184 : index
    %c0_97 = arith.constant 0 : index
    %71 = vector.load %arg6[%c184, %c0_97] : memref<216x640xf32, #tpu.memory_space<vmem>>, vector<8x640xf32>
    tpu.vector_store %arg6[%c184, %c0_97], %70 {strides = array<i32>} : memref<216x640xf32, #tpu.memory_space<vmem>>, vector<8x640xf32>,
    %c0_98 = arith.constant 0 : index
    %c0_99 = arith.constant 0 : index
    %c0_100 = arith.constant 0 : index
    %c244 = arith.constant 244 : index
    %72 = vector.load %arg2[%c0_98, %c0_99, %c0_100, %c244] : memref<1x1x8x896xf32, #tpu.memory_space<vmem>>, vector<1x1x8x640xf32>
    %73 = vector.shape_cast %72 : vector<1x1x8x640xf32> to vector<8x640xf32>
    %c192 = arith.constant 192 : index
    %c0_101 = arith.constant 0 : index
    %74 = vector.load %arg6[%c192, %c0_101] : memref<216x640xf32, #tpu.memory_space<vmem>>, vector<8x640xf32>
    tpu.vector_store %arg6[%c192, %c0_101], %73 {strides = array<i32>} : memref<216x640xf32, #tpu.memory_space<vmem>>, vector<8x640xf32>,
    %c0_102 = arith.constant 0 : index
    %c0_103 = arith.constant 0 : index
    %c0_104 = arith.constant 0 : index
    %c134 = arith.constant 134 : index
    %75 = vector.load %arg2[%c0_102, %c0_103, %c0_104, %c134] : memref<1x1x8x896xf32, #tpu.memory_space<vmem>>, vector<1x1x8x640xf32>
    %76 = vector.shape_cast %75 : vector<1x1x8x640xf32> to vector<8x640xf32>
    %c200 = arith.constant 200 : index
    %c0_105 = arith.constant 0 : index
    %77 = vector.load %arg6[%c200, %c0_105] : memref<216x640xf32, #tpu.memory_space<vmem>>, vector<8x640xf32>
    tpu.vector_store %arg6[%c200, %c0_105], %76 {strides = array<i32>} : memref<216x640xf32, #tpu.memory_space<vmem>>, vector<8x640xf32>,
    %c0_106 = arith.constant 0 : index
    %c0_107 = arith.constant 0 : index
    %c0_108 = arith.constant 0 : index
    %c24_109 = arith.constant 24 : index
    %78 = vector.load %arg2[%c0_106, %c0_107, %c0_108, %c24_109] : memref<1x1x8x896xf32, #tpu.memory_space<vmem>>, vector<1x1x8x640xf32>
    %79 = vector.shape_cast %78 : vector<1x1x8x640xf32> to vector<8x640xf32>
    %c208 = arith.constant 208 : index
    %c0_110 = arith.constant 0 : index
    %80 = vector.load %arg6[%c208, %c0_110] : memref<216x640xf32, #tpu.memory_space<vmem>>, vector<8x640xf32>
    tpu.vector_store %arg6[%c208, %c0_110], %79 {strides = array<i32>} : memref<216x640xf32, #tpu.memory_space<vmem>>, vector<8x640xf32>,
    %c0_111 = arith.constant 0 : index
    %c0_112 = arith.constant 0 : index
    %81 = vector.load %arg3[%c0_111, %c0_112] : memref<32x216xf32, #tpu.memory_space<vmem>>, vector<32x216xf32>
    %c0_113 = arith.constant 0 : index
    %c0_114 = arith.constant 0 : index
    %82 = vector.load %arg6[%c0_113, %c0_114] : memref<216x640xf32, #tpu.memory_space<vmem>>, vector<216x640xf32>
    %cst = arith.constant dense<0.000000e+00> : vector<32x640xf32>
    %83 = tpu.matmul %81, %82, %cst {dimension_numbers = #tpu.dot_dimension_numbers<[1], [0], [0], [1], [0, 0, 1, 1], [], []>} : vector<32x216xf32>, vector<216x640xf32>, vector<32x640xf32> -> vector<32x640xf32>
    %c0_115 = arith.constant 0 : index
    %c0_116 = arith.constant 0 : index
    %84 = vector.load %arg4[%c0_115, %c0_116] : memref<32x1xf32, #tpu.memory_space<vmem>>, vector<32x1xf32>
    %85 = vector.broadcast %84 : vector<32x1xf32> to vector<32x640xf32>
    %86 = arith.addf %83, %85 : vector<32x640xf32>
    %c0_117 = arith.constant 0 : index
    %c0_118 = arith.constant 0 : index
    %c0_119 = arith.constant 0 : index
    %87 = vector.load %arg5[%c0_117, %c0_118, %c0_119] : memref<1x32x640xf32, #tpu.memory_space<vmem>>, vector<1x32x640xf32>
    %88 = vector.shape_cast %87 : vector<1x32x640xf32> to vector<32x640xf32>
    %89 = vector.shape_cast %86 : vector<32x640xf32> to vector<1x32x640xf32>
    tpu.vector_store %arg5[%c0_117, %c0_118, %c0_119], %89 {strides = array<i32>} : memref<1x32x640xf32, #tpu.memory_space<vmem>>, vector<1x32x640xf32>,
    return
  }
  func.func @transform_0(%arg0: i32, %arg1: i32) -> (i32, i32, i32, i32) {
    %c0_i32 = arith.constant 0 : i32
    %c0_i32_0 = arith.constant 0 : i32
    %c0_i32_1 = arith.constant 0 : i32
    return %arg0, %arg1, %c0_i32, %c0_i32_0 : i32, i32, i32, i32
  }
  func.func @transform_1(%arg0: i32, %arg1: i32) -> (i32, i32) {
    %c0_i32 = arith.constant 0 : i32
    %c0_i32_0 = arith.constant 0 : i32
    %c0_i32_1 = arith.constant 0 : i32
    return %c0_i32, %c0_i32_0 : i32, i32
  }
  func.func @transform_2(%arg0: i32, %arg1: i32) -> (i32, i32) {
    %c0_i32 = arith.constant 0 : i32
    %c0_i32_0 = arith.constant 0 : i32
    %c0_i32_1 = arith.constant 0 : i32
    return %c0_i32, %c0_i32_0 : i32, i32
  }
  func.func @transform_3(%arg0: i32, %arg1: i32) -> (i32, i32, i32) {
    %c0_i32 = arith.constant 0 : i32
    %c0_i32_0 = arith.constant 0 : i32
    return %arg0, %c0_i32, %arg1 : i32, i32, i32
  }
}

</mosaic_0001>

<llo_original>
// kernel: tile.8
$region0: #{tile.8}
  #allocation2 [shape = 's32[1]{0}', space=sflag, size = 0x4, scoped, tag = 'scoped memory for tile.8']
  %s0 = inlined_call_operand.hbm [shape: f32[8], index: 0, kind: input, shape index: {}]
  %s1 = inlined_call_operand.vmem [shape: f32[4,8], index: 1, kind: output, shape index: {}]
  $region1: #{tile.8} parent=0
    #allocation0 [shape = 'u8[512]{0}', space=vmem, size = 0x400, scoped, tag = 'operand span for operand 0']
    #allocation1 [shape = 's32[1]{0}', space=sflag, size = 0x4, scoped, tag = 'scoped memory for tile.8']
    %2 = vsyncpa [#allocation1], 0
    // Predicated region
    $region2: #{tile.8} parent=1 // pred_check
      _
    $region3: #{tile.8} parent=1 // pred_check_branch
      %4 = sbr.rel (0) target = $region5
    $region4: #{tile.8} parent=1 // pred_region
      %s6 = ssub.s32 16, 16
      %7 = vsyncadd [#allocation1], %s6
      %s9 = sshll.u32 [#allocation0], 4
      %s10 = int_to_ptr.vmem [resolvable:$true] %s9
      %12 = dma.hbm_to_vmem [thread:$0]  %s0, 16, %s10, [#allocation1]
    $region5: #{tile.8} parent=1 // pred_fallthru
      _
    // Predicated region
    $region6: #{tile.8} parent=1 // pred_check
      _
    $region7: #{tile.8} parent=1 // pred_check_branch
      %14 = sbr.rel (0) target = $region9
    $region8: #{tile.8} parent=1 // pred_region
      %15 = dma.done [#allocation1], 16
    $region9: #{tile.8} parent=1 // pred_fallthru
      _
    %v16 = vld [vmem:[#allocation0] ss:$0 sm:$0xff]
    %17 = vst [vmem:[%s1] sm:$0xf] %v16
    %18 = vsyncpa [#allocation1], 1

// kernel: conv_transpose3d_pallas.1
$region0: #{conv_transpose3d_pallas.1}
  #allocation0 [shape = 'u32[]', space=smem, size = 0x4, offset = 0x4, fixed_abs, tag = 'smem constant byte address 0x4 - core index']
  #allocation1 [shape = 'u32[144,128]{1,0:T(1,128)}', space=vmem, size = 0x12000, scoped, tag = 'internal scratch']
  #allocation2 [shape = 'f32[216,640]{1,0:T(8,128)}', space=vmem, size = 0x87000, scoped, tag = 'scratch operand']
  %s0 = inlined_call_operand.vmem [shape: f32[2,1,8,896], index: 0, kind: input, shape index: {}]
  %s1 = inlined_call_operand.vmem [shape: f32[32,216], index: 1, kind: input, shape index: {}]
  %s2 = inlined_call_operand.vmem [shape: f32[32,1], index: 2, kind: input, shape index: {}]
  %s3 = inlined_call_operand.vmem [shape: f32[2,32,640], index: 3, kind: output, shape index: {}]
  %s4 = sld [smem:[#allocation0]]
  $region45: #{conv_transpose3d_pallas.1} parent=0
    _
  %s6 = ssub.s32 1, %s4
  %s7 = scalar_select 0, %s6, %s4
  loop: start=0, step=1, limit=4
  $region2: #{conv_transpose3d_pallas.1} parent=0 // loop_pre_header
    _
  $region3: #{conv_transpose3d_pallas.1} parent=0 // loop_header
    %s9 = sphi 0, %s13
    %p10 = scmp.ge.s32.totalorder %s9, 4
    %s16 = sphi 0, %s28
    %s17 = sphi 0, %s24
    %s18 = sphi 0, %s16
    %s19 = sphi 0, %s17
    %s20 = sphi 0, %s18
    %s21 = sphi 0, %s19
    %s33 = sphi 0, %s35
    %s36 = sphi 0, %s33
    %s37 = sphi 0, %s36
    %s53 = sphi 0, %s37
    %s57 = sphi 0, %s57
    %s59 = sphi 0, %s57
    %s60 = sphi 0, %s59
    %s74 = sphi 0, %s60
    %s78 = sphi 0, %s78
    %s80 = sphi 0, %s78
    %s81 = sphi 0, %s80
    %s95 = sphi 0, %s81
    %s103 = sphi 0, %s105
    %s106 = sphi 0, %s103
    %s107 = sphi 0, %s106
    %s123 = sphi 0, %s107
  $region4: #{conv_transpose3d_pallas.1} parent=0 // loop_header_branch
    %12 = sbr.rel (%p10) target = $region8
  $region5: #{conv_transpose3d_pallas.1} parent=0 // loop_body
    %s14 = ssub.s32 %s9, 1
    %s15 = ssub.s32 %s9, 2
    %s22 = sadd.s32 1, %s17
    %p23 = scmp.ge.s32.totalorder %s22, 1
    %s24 = scalar_select %p23, 0, %s22
    %s25 = sadd.s32 1, %s16
    %s26 = scalar_select %p23, %s25, %s16
    %p27 = scmp.ge.s32.totalorder %s26, 2
    %s28 = scalar_select %p27, 0, %s26
    %s29 = ssub.s32 %s16, %s28
    %s30 = ssub.s32 %s17, %s24
    %s31 = sor.u32 %s29, %s30
    %p32 = scmp.eq.s32.totalorder %s31, 0
    %s34 = sadd.s32 %s33, 1
    %s35 = scalar_select %p32, %s33, %s34
    %p38 = pneg %p32
    %p39 = scmp.eq.s32.totalorder %s9, 1
    %p40 = por %p38, %p39
    %p41 = scmp.ne.s32.totalorder %s33, %s36
    %p42 = scmp.eq.s32.totalorder %s9, 0
    %p43 = por %p41, %p42
    %p44 = scmp.ne.s32.totalorder %s33, %s36
    %p45 = scmp.eq.s32.totalorder %s14, 1
    %p46 = por %p44, %p45
    %p47 = scmp.ne.s32.totalorder %s36, %s37
    %p48 = scmp.eq.s32.totalorder %s14, 0
    %p49 = por %p47, %p48
    %p50 = scmp.ne.s32.totalorder %s36, %s37
    %p51 = scmp.eq.s32.totalorder %s15, 1
    %p52 = por %p50, %p51
    %p54 = scmp.ne.s32.totalorder %s37, %s53
    %p55 = scmp.eq.s32.totalorder %s15, 0
    %p56 = por %p54, %p55
    %s58 = sadd.s32 %s57, 1
    %p61 = scmp.eq.s32.totalorder %s9, 1
    %p62 = scmp.ne.s32.totalorder %s57, %s59
    %p63 = scmp.eq.s32.totalorder %s9, 0
    %p64 = por %p62, %p63
    %p65 = scmp.ne.s32.totalorder %s57, %s59
    %p66 = scmp.eq.s32.totalorder %s14, 1
    %p67 = por %p65, %p66
    %p68 = scmp.ne.s32.totalorder %s59, %s60
    %p69 = scmp.eq.s32.totalorder %s14, 0
    %p70 = por %p68, %p69
    %p71 = scmp.ne.s32.totalorder %s59, %s60
    %p72 = scmp.eq.s32.totalorder %s15, 1
    %p73 = por %p71, %p72
    %p75 = scmp.ne.s32.totalorder %s60, %s74
    %p76 = scmp.eq.s32.totalorder %s15, 0
    %p77 = por %p75, %p76
    %s79 = sadd.s32 %s78, 1
    %p82 = scmp.eq.s32.totalorder %s9, 1
    %p83 = scmp.ne.s32.totalorder %s78, %s80
    %p84 = scmp.eq.s32.totalorder %s9, 0
    %p85 = por %p83, %p84
    %p86 = scmp.ne.s32.totalorder %s78, %s80
    %p87 = scmp.eq.s32.totalorder %s14, 1
    %p88 = por %p86, %p87
    %p89 = scmp.ne.s32.totalorder %s80, %s81
    %p90 = scmp.eq.s32.totalorder %s14, 0
    %p91 = por %p89, %p90
    %p92 = scmp.ne.s32.totalorder %s80, %s81
    %p93 = scmp.eq.s32.totalorder %s15, 1
    %p94 = por %p92, %p93
    %p96 = scmp.ne.s32.totalorder %s81, %s95
    %p97 = scmp.eq.s32.totalorder %s15, 0
    %p98 = por %p96, %p97
    %s99 = ssub.s32 %s16, %s28
    %s100 = ssub.s32 %s17, %s24
    %s101 = sor.u32 %s99, %s100
    %p102 = scmp.eq.s32.totalorder %s101, 0
    %s104 = sadd.s32 %s103, 1
    %s105 = scalar_select %p102, %s103, %s104
    %p108 = pneg %p102
    %p109 = scmp.eq.s32.totalorder %s9, 1
    %p110 = por %p108, %p109
    %p111 = scmp.ne.s32.totalorder %s103, %s106
    %p112 = scmp.eq.s32.totalorder %s9, 0
    %p113 = por %p111, %p112
    %p114 = scmp.ne.s32.totalorder %s103, %s106
    %p115 = scmp.eq.s32.totalorder %s14, 1
    %p116 = por %p114, %p115
    %p117 = scmp.ne.s32.totalorder %s106, %s107
    %p118 = scmp.eq.s32.totalorder %s14, 0
    %p119 = por %p117, %p118
    %p120 = scmp.ne.s32.totalorder %s106, %s107
    %p121 = scmp.eq.s32.totalorder %s15, 1
    %p122 = por %p120, %p121
    %p124 = scmp.ne.s32.totalorder %s107, %s123
    %p125 = scmp.eq.s32.totalorder %s15, 0
    %p126 = por %p124, %p125
    %p127 = scmp.le.s32.totalorder 1, %s9
    %p128 = scmp.lt.s32.totalorder %s9, 3
    %p129 = pnand %p127, %p128
    %p130 = pneg %p129
    // Predicated region
    $region9: #{conv_transpose3d_pallas.1} parent=5 // pred_check
      _
    $region10: #{conv_transpose3d_pallas.1} parent=5 // pred_check_branch
      %132 = sbr.rel (%p129) target = $region12
    $region11: #{conv_transpose3d_pallas.1} parent=5 // pred_region
      %s133 = ssub.s32 %s9, 1
      // Predicated region
      $region13: #{conv_transpose3d_pallas.1} parent=11 // pred_check
        %p134 = pneg %p70
      $region14: #{conv_transpose3d_pallas.1} parent=11 // pred_check_branch
        %136 = sbr.rel (%p134) target = $region16
      $region15: #{conv_transpose3d_pallas.1} parent=11 // pred_region
        _
      $region16: #{conv_transpose3d_pallas.1} parent=11 // pred_fallthru
        _
      // Predicated region
      $region17: #{conv_transpose3d_pallas.1} parent=11 // pred_check
        %p137 = pneg %p91
      $region18: #{conv_transpose3d_pallas.1} parent=11 // pred_check_branch
        %139 = sbr.rel (%p137) target = $region20
      $region19: #{conv_transpose3d_pallas.1} parent=11 // pred_region
        _
      $region20: #{conv_transpose3d_pallas.1} parent=11 // pred_fallthru
        _
    $region12: #{conv_transpose3d_pallas.1} parent=5 // pred_fallthru
      _
    %p140 = scmp.lt.s32.totalorder %s9, 2
    // Predicated region
    $region21: #{conv_transpose3d_pallas.1} parent=5 // pred_check
      %p141 = pneg %p140
    $region22: #{conv_transpose3d_pallas.1} parent=5 // pred_check_branch
      %143 = sbr.rel (%p141) target = $region24
    $region23: #{conv_transpose3d_pallas.1} parent=5 // pred_region
      // Predicated region
      $region25: #{conv_transpose3d_pallas.1} parent=23 // pred_check
        %p144 = pneg %p43
      $region26: #{conv_transpose3d_pallas.1} parent=23 // pred_check_branch
        %146 = sbr.rel (%p144) target = $region28
      $region27: #{conv_transpose3d_pallas.1} parent=23 // pred_region
        %p147 = scmp.lt.s32.totalorder %s16, 1
        %s148 = scalar_select %p147, %s16, 1
        %p149 = scmp.lt.s32.totalorder %s17, 0
        %s150 = scalar_select %p149, %s17, 0
        %s151 = smul.addr %s150, 7
        %s152 = smul.addr %s148, 7
        %s153 = sadd.s32 %s151, %s152
        %s154 = smul.addr %s153, 8
        %s155 = scalar_lea.vmem %s0, %s154
      $region28: #{conv_transpose3d_pallas.1} parent=23 // pred_fallthru
        _
    $region24: #{conv_transpose3d_pallas.1} parent=5 // pred_fallthru
      _
    %p156 = scmp.le.s32.totalorder 1, %s9
    %p157 = scmp.lt.s32.totalorder %s9, 3
    %p158 = pnand %p156, %p157
    %p159 = pneg %p158
    // Predicated region
    $region29: #{conv_transpose3d_pallas.1} parent=5 // pred_check
      _
    $region30: #{conv_transpose3d_pallas.1} parent=5 // pred_check_branch
      %161 = sbr.rel (%p158) target = $region32
    $region31: #{conv_transpose3d_pallas.1} parent=5 // pred_region
      %s162 = ssub.s32 %s9, 1
      %p163 = scmp.lt.s32.totalorder %s18, 1
      %s164 = scalar_select %p163, %s18, 1
      %p165 = scmp.lt.s32.totalorder %s19, 0
      %s166 = scalar_select %p165, %s19, 0
      %s167 = smul.addr %s166, 7
      %s168 = smul.addr %s164, 7
      %s169 = sadd.s32 %s167, %s168
      %s170 = smul.addr %s169, 8
      %s171 = scalar_lea.vmem %s0, %s170
      %p172 = pneg %p49
      %p173 = pneg %p46
      %p174 = pneg %p70
      %p175 = pneg %p67
      %p176 = pneg %p91
      %p177 = pneg %p88
      %p178 = pneg %p119
      %p179 = pneg %p116
      %s180 = smul.u32 5, %s19
      %p181 = scmp.lt.s32.totalorder %s18, 1
      %s182 = scalar_select %p181, %s18, 1
      %p183 = scmp.lt.s32.totalorder %s180, 4
      %s184 = scalar_select %p183, %s180, 4
      %s185 = smul.addr %s182, 20
      %s186 = sadd.s32 %s184, %s185
      %s187 = smul.addr %s186, 8
      %s188 = scalar_lea.vmem %s3, %s187
      %p189 = scmp.lt.s32.totalorder %s18, 1
      %s190 = scalar_select %p189, %s18, 1
      %p191 = scmp.lt.s32.totalorder %s19, 0
      %s192 = scalar_select %p191, %s19, 0
      %s193 = smul.addr %s192, 7
      %s194 = smul.addr %s190, 7
      %s195 = sadd.s32 %s193, %s194
      %s196 = smul.addr %s195, 8
      %s197 = scalar_lea.vmem %s0, %s196
      %s198 = smul.u32 5, %s19
      %p199 = scmp.lt.s32.totalorder %s18, 1
      %s200 = scalar_select %p199, %s18, 1
      %p201 = scmp.lt.s32.totalorder %s198, 4
      %s202 = scalar_select %p201, %s198, 4
      %s203 = smul.addr %s200, 20
      %s204 = sadd.s32 %s202, %s203
      %s205 = smul.addr %s204, 8
      %s206 = scalar_lea.vmem %s3, %s205
      %s207 = smul.u32 5, %s19
      %v208 = vld [vmem:[%s197 + $0x8] sm:$0xff]
      %v209 = vld [vmem:[%s197 + $0x10] sm:$0xff]
      %v210 = vld [vmem:[%s197 + $0x18] sm:$0xff]
      %v211 = vld [vmem:[%s197 + $0x20] sm:$0xff]
      %v212 = vld [vmem:[%s197 + $0x28] sm:$0xff]
      %v213 = vld [vmem:[%s197 + $0x30] sm:$0xff]
      %220 = vrot.lane.b32.xlu0 %v208, 24
      %v221 = vpop.permute.xlu0 %220
      %222 = vrot.lane.b32.xlu0 %v209, 24
      %v223 = vpop.permute.xlu0 %222
      %224 = vrot.lane.b32.xlu0 %v210, 24
      %v225 = vpop.permute.xlu0 %224
      %226 = vrot.lane.b32.xlu0 %v211, 24
      %v227 = vpop.permute.xlu0 %226
      %228 = vrot.lane.b32.xlu0 %v212, 24
      %v229 = vpop.permute.xlu0 %228
      %230 = vrot.lane.b32.xlu0 %v213, 24
      %v231 = vpop.permute.xlu0 %230
      %vm232 = vcmask 195584
      %v233 = vsel %vm232, %v221, %v223
      %v234 = vsel %vm232, %v223, %v225
      %v235 = vsel %vm232, %v225, %v227
      %v236 = vsel %vm232, %v227, %v229
      %v237 = vsel %vm232, %v229, %v231
      %243 = vst [vmem:[#allocation2] sm:$0xff] %v233
      %244 = vst [vmem:[#allocation2 + $0x8] sm:$0xff] %v234
      %245 = vst [vmem:[#allocation2 + $0x10] sm:$0xff] %v235
      %246 = vst [vmem:[#allocation2 + $0x18] sm:$0xff] %v236
      %247 = vst [vmem:[#allocation2 + $0x20] sm:$0xff] %v237
      %v248 = vld [vmem:[%s197 + $0x8] sm:$0xff]
      %v249 = vld [vmem:[%s197 + $0x10] sm:$0xff]
      %v250 = vld [vmem:[%s197 + $0x18] sm:$0xff]
      %v251 = vld [vmem:[%s197 + $0x20] sm:$0xff]
      %v252 = vld [vmem:[%s197 + $0x28] sm:$0xff]
      %v253 = vld [vmem:[%s197 + $0x30] sm:$0xff]
      %260 = vrot.lane.b32.xlu0 %v248, 25
      %v261 = vpop.permute.xlu0 %260
      %262 = vrot.lane.b32.xlu0 %v249, 25
      %v263 = vpop.permute.xlu0 %262
      %264 = vrot.lane.b32.xlu0 %v250, 25
      %v265 = vpop.permute.xlu0 %264
      %266 = vrot.lane.b32.xlu0 %v251, 25
      %v267 = vpop.permute.xlu0 %266
      %268 = vrot.lane.b32.xlu0 %v252, 25
      %v269 = vpop.permute.xlu0 %268
      %270 = vrot.lane.b32.xlu0 %v253, 25
      %v271 = vpop.permute.xlu0 %270
      %vm272 = vcmask 203776
      %v273 = vsel %vm272, %v261, %v263
      %v274 = vsel %vm272, %v263, %v265
      %v275 = vsel %vm272, %v265, %v267
      %v276 = vsel %vm272, %v267, %v269
      %v277 = vsel %vm272, %v269, %v271
      %283 = vst [vmem:[#allocation2 + $0x28] sm:$0xff] %v273
      %284 = vst [vmem:[#allocation2 + $0x30] sm:$0xff] %v274
      %285 = vst [vmem:[#allocation2 + $0x38] sm:$0xff] %v275
      %286 = vst [vmem:[#allocation2 + $0x40] sm:$0xff] %v276
      %287 = vst [vmem:[#allocation2 + $0x48] sm:$0xff] %v277
      %v288 = vld [vmem:[%s197 + $0x8] sm:$0xff]
      %v289 = vld [vmem:[%s197 + $0x10] sm:$0xff]
      %v290 = vld [vmem:[%s197 + $0x18] sm:$0xff]
      %v291 = vld [vmem:[%s197 + $0x20] sm:$0xff]
      %v292 = vld [vmem:[%s197 + $0x28] sm:$0xff]
      %v293 = vld [vmem:[%s197 + $0x30] sm:$0xff]
      %300 = vrot.lane.b32.xlu0 %v288, 35
      %v301 = vpop.permute.xlu0 %300
      %302 = vrot.lane.b32.xlu0 %v289, 35
      %v303 = vpop.permute.xlu0 %302
      %304 = vrot.lane.b32.xlu0 %v290, 35
      %v305 = vpop.permute.xlu0 %304
      %306 = vrot.lane.b32.xlu0 %v291, 35
      %v307 = vpop.permute.xlu0 %306
      %308 = vrot.lane.b32.xlu0 %v292, 35
      %v309 = vpop.permute.xlu0 %308
      %310 = vrot.lane.b32.xlu0 %v293, 35
      %v311 = vpop.permute.xlu0 %310
      %vm312 = vcmask 285696
      %v313 = vsel %vm312, %v301, %v303
      %v314 = vsel %vm312, %v303, %v305
      %v315 = vsel %vm312, %v305, %v307
      %v316 = vsel %vm312, %v307, %v309
      %v317 = vsel %vm312, %v309, %v311
      %323 = vst [vmem:[#allocation2 + $0x50] sm:$0xff] %v313
      %324 = vst [vmem:[#allocation2 + $0x58] sm:$0xff] %v314
      %325 = vst [vmem:[#allocation2 + $0x60] sm:$0xff] %v315
      %326 = vst [vmem:[#allocation2 + $0x68] sm:$0xff] %v316
      %327 = vst [vmem:[#allocation2 + $0x70] sm:$0xff] %v317
      %v328 = vld [vmem:[%s197 + $0x8] sm:$0xff]
      %v329 = vld [vmem:[%s197 + $0x10] sm:$0xff]
      %v330 = vld [vmem:[%s197 + $0x18] sm:$0xff]
      %v331 = vld [vmem:[%s197 + $0x20] sm:$0xff]
      %v332 = vld [vmem:[%s197 + $0x28] sm:$0xff]
      %v333 = vld [vmem:[%s197 + $0x30] sm:$0xff]
      %340 = vrot.lane.b32.xlu0 %v328, 36
      %v341 = vpop.permute.xlu0 %340
      %342 = vrot.lane.b32.xlu0 %v329, 36
      %v343 = vpop.permute.xlu0 %342
      %344 = vrot.lane.b32.xlu0 %v330, 36
      %v345 = vpop.permute.xlu0 %344
      %346 = vrot.lane.b32.xlu0 %v331, 36
      %v347 = vpop.permute.xlu0 %346
      %348 = vrot.lane.b32.xlu0 %v332, 36
      %v349 = vpop.permute.xlu0 %348
      %350 = vrot.lane.b32.xlu0 %v333, 36
      %v351 = vpop.permute.xlu0 %350
      %vm352 = vcmask 293888
      %v353 = vsel %vm352, %v341, %v343
      %v354 = vsel %vm352, %v343, %v345
      %v355 = vsel %vm352, %v345, %v347
      %v356 = vsel %vm352, %v347, %v349
      %v357 = vsel %vm352, %v349, %v351
      %363 = vst [vmem:[#allocation2 + $0x78] sm:$0xff] %v353
      %364 = vst [vmem:[#allocation2 + $0x80] sm:$0xff] %v354
      %365 = vst [vmem:[#allocation2 + $0x88] sm:$0xff] %v355
      %366 = vst [vmem:[#allocation2 + $0x90] sm:$0xff] %v356
      %367 = vst [vmem:[#allocation2 + $0x98] sm:$0xff] %v357
      %v368 = vld [vmem:[%s197] sm:$0xff]
      %v369 = vld [vmem:[%s197 + $0x8] sm:$0xff]
      %v370 = vld [vmem:[%s197 + $0x10] sm:$0xff]
      %v371 = vld [vmem:[%s197 + $0x18] sm:$0xff]
      %v372 = vld [vmem:[%s197 + $0x20] sm:$0xff]
      %v373 = vld [vmem:[%s197 + $0x28] sm:$0xff]
      %380 = vrot.lane.b32.xlu0 %v368, 6
      %v381 = vpop.permute.xlu0 %380
      %382 = vrot.lane.b32.xlu0 %v369, 6
      %v383 = vpop.permute.xlu0 %382
      %384 = vrot.lane.b32.xlu0 %v370, 6
      %v385 = vpop.permute.xlu0 %384
      %386 = vrot.lane.b32.xlu0 %v371, 6
      %v387 = vpop.permute.xlu0 %386
      %388 = vrot.lane.b32.xlu0 %v372, 6
      %v389 = vpop.permute.xlu0 %388
      %390 = vrot.lane.b32.xlu0 %v373, 6
      %v391 = vpop.permute.xlu0 %390
      %vm392 = vcmask 48128
      %v393 = vsel %vm392, %v381, %v383
      %v394 = vsel %vm392, %v383, %v385
      %v395 = vsel %vm392, %v385, %v387
      %v396 = vsel %vm392, %v387, %v389
      %v397 = vsel %vm392, %v389, %v391
      %403 = vst [vmem:[#allocation2 + $0xa0] sm:$0xff] %v393
      %404 = vst [vmem:[#allocation2 + $0xa8] sm:$0xff] %v394
      %405 = vst [vmem:[#allocation2 + $0xb0] sm:$0xff] %v395
      %406 = vst [vmem:[#allocation2 + $0xb8] sm:$0xff] %v396
      %407 = vst [vmem:[#allocation2 + $0xc0] sm:$0xff] %v397
      %v408 = vld [vmem:[%s197] sm:$0xff]
      %v409 = vld [vmem:[%s197 + $0x8] sm:$0xff]
      %v410 = vld [vmem:[%s197 + $0x10] sm:$0xff]
      %v411 = vld [vmem:[%s197 + $0x18] sm:$0xff]
      %v412 = vld [vmem:[%s197 + $0x20] sm:$0xff]
      %v413 = vld [vmem:[%s197 + $0x28] sm:$0xff]
      %420 = vrot.lane.b32.xlu0 %v408, 7
      %v421 = vpop.permute.xlu0 %420
      %422 = vrot.lane.b32.xlu0 %v409, 7
      %v423 = vpop.permute.xlu0 %422
      %424 = vrot.lane.b32.xlu0 %v410, 7
      %v425 = vpop.permute.xlu0 %424
      %426 = vrot.lane.b32.xlu0 %v411, 7
      %v427 = vpop.permute.xlu0 %426
      %428 = vrot.lane.b32.xlu0 %v412, 7
      %v429 = vpop.permute.xlu0 %428
      %430 = vrot.lane.b32.xlu0 %v413, 7
      %v431 = vpop.permute.xlu0 %430
      %vm432 = vcmask 56320
      %v433 = vsel %vm432, %v421, %v423
      %v434 = vsel %vm432, %v423, %v425
      %v435 = vsel %vm432, %v425, %v427
      %v436 = vsel %vm432, %v427, %v429
      %v437 = vsel %vm432, %v429, %v431
      %443 = vst [vmem:[#allocation2 + $0xc8] sm:$0xff] %v433
      %444 = vst [vmem:[#allocation2 + $0xd0] sm:$0xff] %v434
      %445 = vst [vmem:[#allocation2 + $0xd8] sm:$0xff] %v435
      %446 = vst [vmem:[#allocation2 + $0xe0] sm:$0xff] %v436
      %447 = vst [vmem:[#allocation2 + $0xe8] sm:$0xff] %v437
      %v448 = vld [vmem:[%s197] sm:$0xff]
      %v449 = vld [vmem:[%s197 + $0x8] sm:$0xff]
      %v450 = vld [vmem:[%s197 + $0x10] sm:$0xff]
      %v451 = vld [vmem:[%s197 + $0x18] sm:$0xff]
      %v452 = vld [vmem:[%s197 + $0x20] sm:$0xff]
      %v453 = vld [vmem:[%s197 + $0x28] sm:$0xff]
      %460 = vrot.lane.b32.xlu0 %v448, 17
      %v461 = vpop.permute.xlu0 %460
      %462 = vrot.lane.b32.xlu0 %v449, 17
      %v463 = vpop.permute.xlu0 %462
      %464 = vrot.lane.b32.xlu0 %v450, 17
      %v465 = vpop.permute.xlu0 %464
      %466 = vrot.lane.b32.xlu0 %v451, 17
      %v467 = vpop.permute.xlu0 %466
      %468 = vrot.lane.b32.xlu0 %v452, 17
      %v469 = vpop.permute.xlu0 %468
      %470 = vrot.lane.b32.xlu0 %v453, 17
      %v471 = vpop.permute.xlu0 %470
      %vm472 = vcmask 138240
      %v473 = vsel %vm472, %v461, %v463
      %v474 = vsel %vm472, %v463, %v465
      %v475 = vsel %vm472, %v465, %v467
      %v476 = vsel %vm472, %v467, %v469
      %v477 = vsel %vm472, %v469, %v471
      %483 = vst [vmem:[#allocation2 + $0xf0] sm:$0xff] %v473
      %484 = vst [vmem:[#allocation2 + $0xf8] sm:$0xff] %v474
      %485 = vst [vmem:[#allocation2 + $0x100] sm:$0xff] %v475
      %486 = vst [vmem:[#allocation2 + $0x108] sm:$0xff] %v476
      %487 = vst [vmem:[#allocation2 + $0x110] sm:$0xff] %v477
      %v488 = vld [vmem:[%s197] sm:$0xff]
      %v489 = vld [vmem:[%s197 + $0x8] sm:$0xff]
      %v490 = vld [vmem:[%s197 + $0x10] sm:$0xff]
      %v491 = vld [vmem:[%s197 + $0x18] sm:$0xff]
      %v492 = vld [vmem:[%s197 + $0x20] sm:$0xff]
      %v493 = vld [vmem:[%s197 + $0x28] sm:$0xff]
      %500 = vrot.lane.b32.xlu0 %v488, 18
      %v501 = vpop.permute.xlu0 %500
      %502 = vrot.lane.b32.xlu0 %v489, 18
      %v503 = vpop.permute.xlu0 %502
      %504 = vrot.lane.b32.xlu0 %v490, 18
      %v505 = vpop.permute.xlu0 %504
      %506 = vrot.lane.b32.xlu0 %v491, 18
      %v507 = vpop.permute.xlu0 %506
      %508 = vrot.lane.b32.xlu0 %v492, 18
      %v509 = vpop.permute.xlu0 %508
      %510 = vrot.lane.b32.xlu0 %v493, 18
      %v511 = vpop.permute.xlu0 %510
      %vm512 = vcmask 146432
      %v513 = vsel %vm512, %v501, %v503
      %v514 = vsel %vm512, %v503, %v505
      %v515 = vsel %vm512, %v505, %v507
      %v516 = vsel %vm512, %v507, %v509
      %v517 = vsel %vm512, %v509, %v511
      %523 = vst [vmem:[#allocation2 + $0x118] sm:$0xff] %v513
      %524 = vst [vmem:[#allocation2 + $0x120] sm:$0xff] %v514
      %525 = vst [vmem:[#allocation2 + $0x128] sm:$0xff] %v515
      %526 = vst [vmem:[#allocation2 + $0x130] sm:$0xff] %v516
      %527 = vst [vmem:[#allocation2 + $0x138] sm:$0xff] %v517
      %v528 = vld [vmem:[%s197] sm:$0xff]
      %v529 = vld [vmem:[%s197 + $0x8] sm:$0xff]
      %v530 = vld [vmem:[%s197 + $0x10] sm:$0xff]
      %v531 = vld [vmem:[%s197 + $0x18] sm:$0xff]
      %v532 = vld [vmem:[%s197 + $0x20] sm:$0xff]
      %v533 = vld [vmem:[%s197 + $0x28] sm:$0xff]
      %540 = vrot.lane.b32.xlu0 %v528, 116
      %v541 = vpop.permute.xlu0 %540
      %542 = vrot.lane.b32.xlu0 %v529, 116
      %v543 = vpop.permute.xlu0 %542
      %544 = vrot.lane.b32.xlu0 %v530, 116
      %v545 = vpop.permute.xlu0 %544
      %546 = vrot.lane.b32.xlu0 %v531, 116
      %v547 = vpop.permute.xlu0 %546
      %548 = vrot.lane.b32.xlu0 %v532, 116
      %v549 = vpop.permute.xlu0 %548
      %550 = vrot.lane.b32.xlu0 %v533, 116
      %v551 = vpop.permute.xlu0 %550
      %vm552 = vcmask 949248
      %v553 = vsel %vm552, %v541, %v543
      %v554 = vsel %vm552, %v543, %v545
      %v555 = vsel %vm552, %v545, %v547
      %v556 = vsel %vm552, %v547, %v549
      %v557 = vsel %vm552, %v549, %v551
      %563 = vst [vmem:[#allocation2 + $0x140] sm:$0xff] %v553
      %564 = vst [vmem:[#allocation2 + $0x148] sm:$0xff] %v554
      %565 = vst [vmem:[#allocation2 + $0x150] sm:$0xff] %v555
      %566 = vst [vmem:[#allocation2 + $0x158] sm:$0xff] %v556
      %567 = vst [vmem:[#allocation2 + $0x160] sm:$0xff] %v557
      %v568 = vld [vmem:[%s197] sm:$0xff]
      %v569 = vld [vmem:[%s197 + $0x8] sm:$0xff]
      %v570 = vld [vmem:[%s197 + $0x10] sm:$0xff]
      %v571 = vld [vmem:[%s197 + $0x18] sm:$0xff]
      %v572 = vld [vmem:[%s197 + $0x20] sm:$0xff]
      %v573 = vld [vmem:[%s197 + $0x28] sm:$0xff]
      %580 = vrot.lane.b32.xlu0 %v568, 117
      %v581 = vpop.permute.xlu0 %580
      %582 = vrot.lane.b32.xlu0 %v569, 117
      %v583 = vpop.permute.xlu0 %582
      %584 = vrot.lane.b32.xlu0 %v570, 117
      %v585 = vpop.permute.xlu0 %584
      %586 = vrot.lane.b32.xlu0 %v571, 117
      %v587 = vpop.permute.xlu0 %586
      %588 = vrot.lane.b32.xlu0 %v572, 117
      %v589 = vpop.permute.xlu0 %588
      %590 = vrot.lane.b32.xlu0 %v573, 117
      %v591 = vpop.permute.xlu0 %590
      %vm592 = vcmask 957440
      %v593 = vsel %vm592, %v581, %v583
      %v594 = vsel %vm592, %v583, %v585
      %v595 = vsel %vm592, %v585, %v587
      %v596 = vsel %vm592, %v587, %v589
      %v597 = vsel %vm592, %v589, %v591
      %603 = vst [vmem:[#allocation2 + $0x168] sm:$0xff] %v593
      %604 = vst [vmem:[#allocation2 + $0x170] sm:$0xff] %v594
      %605 = vst [vmem:[#allocation2 + $0x178] sm:$0xff] %v595
      %606 = vst [vmem:[#allocation2 + $0x180] sm:$0xff] %v596
      %607 = vst [vmem:[#allocation2 + $0x188] sm:$0xff] %v597
      %v608 = vld [vmem:[%s197] sm:$0xff]
      %v609 = vld [vmem:[%s197 + $0x8] sm:$0xff]
      %v610 = vld [vmem:[%s197 + $0x10] sm:$0xff]
      %v611 = vld [vmem:[%s197 + $0x18] sm:$0xff]
      %v612 = vld [vmem:[%s197 + $0x20] sm:$0xff]
      %v613 = vld [vmem:[%s197 + $0x28] sm:$0xff]
      %620 = vrot.lane.b32.xlu0 %v608, 127
      %v621 = vpop.permute.xlu0 %620
      %622 = vrot.lane.b32.xlu0 %v609, 127
      %v623 = vpop.permute.xlu0 %622
      %624 = vrot.lane.b32.xlu0 %v610, 127
      %v625 = vpop.permute.xlu0 %624
      %626 = vrot.lane.b32.xlu0 %v611, 127
      %v627 = vpop.permute.xlu0 %626
      %628 = vrot.lane.b32.xlu0 %v612, 127
      %v629 = vpop.permute.xlu0 %628
      %630 = vrot.lane.b32.xlu0 %v613, 127
      %v631 = vpop.permute.xlu0 %630
      %vm632 = vcmask 1039360
      %v633 = vsel %vm632, %v621, %v623
      %v634 = vsel %vm632, %v623, %v625
      %v635 = vsel %vm632, %v625, %v627
      %v636 = vsel %vm632, %v627, %v629
      %v637 = vsel %vm632, %v629, %v631
      %643 = vst [vmem:[#allocation2 + $0x190] sm:$0xff] %v633
      %644 = vst [vmem:[#allocation2 + $0x198] sm:$0xff] %v634
      %645 = vst [vmem:[#allocation2 + $0x1a0] sm:$0xff] %v635
      %646 = vst [vmem:[#allocation2 + $0x1a8] sm:$0xff] %v636
      %647 = vst [vmem:[#allocation2 + $0x1b0] sm:$0xff] %v637
      %v648 = vld [vmem:[%s197] sm:$0xff]
      %v649 = vld [vmem:[%s197 + $0x8] sm:$0xff]
      %v650 = vld [vmem:[%s197 + $0x10] sm:$0xff]
      %v651 = vld [vmem:[%s197 + $0x18] sm:$0xff]
      %v652 = vld [vmem:[%s197 + $0x20] sm:$0xff]
      %653 = vst [vmem:[#allocation2 + $0x1b8] sm:$0xff] %v648
      %654 = vst [vmem:[#allocation2 + $0x1c0] sm:$0xff] %v649
      %655 = vst [vmem:[#allocation2 + $0x1c8] sm:$0xff] %v650
      %656 = vst [vmem:[#allocation2 + $0x1d0] sm:$0xff] %v651
      %657 = vst [vmem:[#allocation2 + $0x1d8] sm:$0xff] %v652
      %v658 = vld [vmem:[%s197 + $0x8] sm:$0xff]
      %v659 = vld [vmem:[%s197 + $0x10] sm:$0xff]
      %v660 = vld [vmem:[%s197 + $0x18] sm:$0xff]
      %v661 = vld [vmem:[%s197 + $0x20] sm:$0xff]
      %v662 = vld [vmem:[%s197 + $0x28] sm:$0xff]
      %v663 = vld [vmem:[%s197 + $0x30] sm:$0xff]
      %670 = vrot.lane.b32.xlu0 %v658, 23
      %v671 = vpop.permute.xlu0 %670
      %672 = vrot.lane.b32.xlu0 %v659, 23
      %v673 = vpop.permute.xlu0 %672
      %674 = vrot.lane.b32.xlu0 %v660, 23
      %v675 = vpop.permute.xlu0 %674
      %676 = vrot.lane.b32.xlu0 %v661, 23
      %v677 = vpop.permute.xlu0 %676
      %678 = vrot.lane.b32.xlu0 %v662, 23
      %v679 = vpop.permute.xlu0 %678
      %680 = vrot.lane.b32.xlu0 %v663, 23
      %v681 = vpop.permute.xlu0 %680
      %vm682 = vcmask 187392
      %v683 = vsel %vm682, %v671, %v673
      %v684 = vsel %vm682, %v673, %v675
      %v685 = vsel %vm682, %v675, %v677
      %v686 = vsel %vm682, %v677, %v679
      %v687 = vsel %vm682, %v679, %v681
      %693 = vst [vmem:[#allocation2 + $0x1e0] sm:$0xff] %v683
      %694 = vst [vmem:[#allocation2 + $0x1e8] sm:$0xff] %v684
      %695 = vst [vmem:[#allocation2 + $0x1f0] sm:$0xff] %v685
      %696 = vst [vmem:[#allocation2 + $0x1f8] sm:$0xff] %v686
      %697 = vst [vmem:[#allocation2 + $0x200] sm:$0xff] %v687
      %v698 = vld [vmem:[%s197 + $0x8] sm:$0xff]
      %v699 = vld [vmem:[%s197 + $0x10] sm:$0xff]
      %v700 = vld [vmem:[%s197 + $0x18] sm:$0xff]
      %v701 = vld [vmem:[%s197 + $0x20] sm:$0xff]
      %v702 = vld [vmem:[%s197 + $0x28] sm:$0xff]
      %v703 = vld [vmem:[%s197 + $0x30] sm:$0xff]
      %710 = vrot.lane.b32.xlu0 %v698, 34
      %v711 = vpop.permute.xlu0 %710
      %712 = vrot.lane.b32.xlu0 %v699, 34
      %v713 = vpop.permute.xlu0 %712
      %714 = vrot.lane.b32.xlu0 %v700, 34
      %v715 = vpop.permute.xlu0 %714
      %716 = vrot.lane.b32.xlu0 %v701, 34
      %v717 = vpop.permute.xlu0 %716
      %718 = vrot.lane.b32.xlu0 %v702, 34
      %v719 = vpop.permute.xlu0 %718
      %720 = vrot.lane.b32.xlu0 %v703, 34
      %v721 = vpop.permute.xlu0 %720
      %vm722 = vcmask 277504
      %v723 = vsel %vm722, %v711, %v713
      %v724 = vsel %vm722, %v713, %v715
      %v725 = vsel %vm722, %v715, %v717
      %v726 = vsel %vm722, %v717, %v719
      %v727 = vsel %vm722, %v719, %v721
      %733 = vst [vmem:[#allocation2 + $0x208] sm:$0xff] %v723
      %734 = vst [vmem:[#allocation2 + $0x210] sm:$0xff] %v724
      %735 = vst [vmem:[#allocation2 + $0x218] sm:$0xff] %v725
      %736 = vst [vmem:[#allocation2 + $0x220] sm:$0xff] %v726
      %737 = vst [vmem:[#allocation2 + $0x228] sm:$0xff] %v727
      %v738 = vld [vmem:[%s197] sm:$0xff]
      %v739 = vld [vmem:[%s197 + $0x8] sm:$0xff]
      %v740 = vld [vmem:[%s197 + $0x10] sm:$0xff]
      %v741 = vld [vmem:[%s197 + $0x18] sm:$0xff]
      %v742 = vld [vmem:[%s197 + $0x20] sm:$0xff]
      %v743 = vld [vmem:[%s197 + $0x28] sm:$0xff]
      %750 = vrot.lane.b32.xlu0 %v738, 5
      %v751 = vpop.permute.xlu0 %750
      %752 = vrot.lane.b32.xlu0 %v739, 5
      %v753 = vpop.permute.xlu0 %752
      %754 = vrot.lane.b32.xlu0 %v740, 5
      %v755 = vpop.permute.xlu0 %754
      %756 = vrot.lane.b32.xlu0 %v741, 5
      %v757 = vpop.permute.xlu0 %756
      %758 = vrot.lane.b32.xlu0 %v742, 5
      %v759 = vpop.permute.xlu0 %758
      %760 = vrot.lane.b32.xlu0 %v743, 5
      %v761 = vpop.permute.xlu0 %760
      %vm762 = vcmask 39936
      %v763 = vsel %vm762, %v751, %v753
      %v764 = vsel %vm762, %v753, %v755
      %v765 = vsel %vm762, %v755, %v757
      %v766 = vsel %vm762, %v757, %v759
      %v767 = vsel %vm762, %v759, %v761
      %773 = vst [vmem:[#allocation2 + $0x230] sm:$0xff] %v763
      %774 = vst [vmem:[#allocation2 + $0x238] sm:$0xff] %v764
      %775 = vst [vmem:[#allocation2 + $0x240] sm:$0xff] %v765
      %776 = vst [vmem:[#allocation2 + $0x248] sm:$0xff] %v766
      %777 = vst [vmem:[#allocation2 + $0x250] sm:$0xff] %v767
      %v778 = vld [vmem:[%s197] sm:$0xff]
      %v779 = vld [vmem:[%s197 + $0x8] sm:$0xff]
      %v780 = vld [vmem:[%s197 + $0x10] sm:$0xff]
      %v781 = vld [vmem:[%s197 + $0x18] sm:$0xff]
      %v782 = vld [vmem:[%s197 + $0x20] sm:$0xff]
      %v783 = vld [vmem:[%s197 + $0x28] sm:$0xff]
      %790 = vrot.lane.b32.xlu0 %v778, 16
      %v791 = vpop.permute.xlu0 %790
      %792 = vrot.lane.b32.xlu0 %v779, 16
      %v793 = vpop.permute.xlu0 %792
      %794 = vrot.lane.b32.xlu0 %v780, 16
      %v795 = vpop.permute.xlu0 %794
      %796 = vrot.lane.b32.xlu0 %v781, 16
      %v797 = vpop.permute.xlu0 %796
      %798 = vrot.lane.b32.xlu0 %v782, 16
      %v799 = vpop.permute.xlu0 %798
      %800 = vrot.lane.b32.xlu0 %v783, 16
      %v801 = vpop.permute.xlu0 %800
      %vm802 = vcmask 130048
      %v803 = vsel %vm802, %v791, %v793
      %v804 = vsel %vm802, %v793, %v795
      %v805 = vsel %vm802, %v795, %v797
      %v806 = vsel %vm802, %v797, %v799
      %v807 = vsel %vm802, %v799, %v801
      %813 = vst [vmem:[#allocation2 + $0x258] sm:$0xff] %v803
      %814 = vst [vmem:[#allocation2 + $0x260] sm:$0xff] %v804
      %815 = vst [vmem:[#allocation2 + $0x268] sm:$0xff] %v805
      %816 = vst [vmem:[#allocation2 + $0x270] sm:$0xff] %v806
      %817 = vst [vmem:[#allocation2 + $0x278] sm:$0xff] %v807
      %v818 = vld [vmem:[%s197] sm:$0xff]
      %v819 = vld [vmem:[%s197 + $0x8] sm:$0xff]
      %v820 = vld [vmem:[%s197 + $0x10] sm:$0xff]
      %v821 = vld [vmem:[%s197 + $0x18] sm:$0xff]
      %v822 = vld [vmem:[%s197 + $0x20] sm:$0xff]
      %v823 = vld [vmem:[%s197 + $0x28] sm:$0xff]
      %830 = vrot.lane.b32.xlu0 %v818, 115
      %v831 = vpop.permute.xlu0 %830
      %832 = vrot.lane.b32.xlu0 %v819, 115
      %v833 = vpop.permute.xlu0 %832
      %834 = vrot.lane.b32.xlu0 %v820, 115
      %v835 = vpop.permute.xlu0 %834
      %836 = vrot.lane.b32.xlu0 %v821, 115
      %v837 = vpop.permute.xlu0 %836
      %838 = vrot.lane.b32.xlu0 %v822, 115
      %v839 = vpop.permute.xlu0 %838
      %840 = vrot.lane.b32.xlu0 %v823, 115
      %v841 = vpop.permute.xlu0 %840
      %vm842 = vcmask 941056
      %v843 = vsel %vm842, %v831, %v833
      %v844 = vsel %vm842, %v833, %v835
      %v845 = vsel %vm842, %v835, %v837
      %v846 = vsel %vm842, %v837, %v839
      %v847 = vsel %vm842, %v839, %v841
      %853 = vst [vmem:[#allocation2 + $0x280] sm:$0xff] %v843
      %854 = vst [vmem:[#allocation2 + $0x288] sm:$0xff] %v844
      %855 = vst [vmem:[#allocation2 + $0x290] sm:$0xff] %v845
      %856 = vst [vmem:[#allocation2 + $0x298] sm:$0xff] %v846
      %857 = vst [vmem:[#allocation2 + $0x2a0] sm:$0xff] %v847
      %v858 = vld [vmem:[%s197] sm:$0xff]
      %v859 = vld [vmem:[%s197 + $0x8] sm:$0xff]
      %v860 = vld [vmem:[%s197 + $0x10] sm:$0xff]
      %v861 = vld [vmem:[%s197 + $0x18] sm:$0xff]
      %v862 = vld [vmem:[%s197 + $0x20] sm:$0xff]
      %v863 = vld [vmem:[%s197 + $0x28] sm:$0xff]
      %870 = vrot.lane.b32.xlu0 %v858, 126
      %v871 = vpop.permute.xlu0 %870
      %872 = vrot.lane.b32.xlu0 %v859, 126
      %v873 = vpop.permute.xlu0 %872
      %874 = vrot.lane.b32.xlu0 %v860, 126
      %v875 = vpop.permute.xlu0 %874
      %876 = vrot.lane.b32.xlu0 %v861, 126
      %v877 = vpop.permute.xlu0 %876
      %878 = vrot.lane.b32.xlu0 %v862, 126
      %v879 = vpop.permute.xlu0 %878
      %880 = vrot.lane.b32.xlu0 %v863, 126
      %v881 = vpop.permute.xlu0 %880
      %vm882 = vcmask 1031168
      %v883 = vsel %vm882, %v871, %v873
      %v884 = vsel %vm882, %v873, %v875
      %v885 = vsel %vm882, %v875, %v877
      %v886 = vsel %vm882, %v877, %v879
      %v887 = vsel %vm882, %v879, %v881
      %893 = vst [vmem:[#allocation2 + $0x2a8] sm:$0xff] %v883
      %894 = vst [vmem:[#allocation2 + $0x2b0] sm:$0xff] %v884
      %895 = vst [vmem:[#allocation2 + $0x2b8] sm:$0xff] %v885
      %896 = vst [vmem:[#allocation2 + $0x2c0] sm:$0xff] %v886
      %897 = vst [vmem:[#allocation2 + $0x2c8] sm:$0xff] %v887
      %v898 = vld [vmem:[%s197 + $0x8] sm:$0xff]
      %v899 = vld [vmem:[%s197 + $0x10] sm:$0xff]
      %v900 = vld [vmem:[%s197 + $0x18] sm:$0xff]
      %v901 = vld [vmem:[%s197 + $0x20] sm:$0xff]
      %v902 = vld [vmem:[%s197 + $0x28] sm:$0xff]
      %v903 = vld [vmem:[%s197 + $0x30] sm:$0xff]
      %910 = vrot.lane.b32.xlu0 %v898, 13
      %v911 = vpop.permute.xlu0 %910
      %912 = vrot.lane.b32.xlu0 %v899, 13
      %v913 = vpop.permute.xlu0 %912
      %914 = vrot.lane.b32.xlu0 %v900, 13
      %v915 = vpop.permute.xlu0 %914
      %916 = vrot.lane.b32.xlu0 %v901, 13
      %v917 = vpop.permute.xlu0 %916
      %918 = vrot.lane.b32.xlu0 %v902, 13
      %v919 = vpop.permute.xlu0 %918
      %920 = vrot.lane.b32.xlu0 %v903, 13
      %v921 = vpop.permute.xlu0 %920
      %vm922 = vcmask 105472
      %v923 = vsel %vm922, %v911, %v913
      %v924 = vsel %vm922, %v913, %v915
      %v925 = vsel %vm922, %v915, %v917
      %v926 = vsel %vm922, %v917, %v919
      %v927 = vsel %vm922, %v919, %v921
      %933 = vst [vmem:[#allocation2 + $0x2d0] sm:$0xff] %v923
      %934 = vst [vmem:[#allocation2 + $0x2d8] sm:$0xff] %v924
      %935 = vst [vmem:[#allocation2 + $0x2e0] sm:$0xff] %v925
      %936 = vst [vmem:[#allocation2 + $0x2e8] sm:$0xff] %v926
      %937 = vst [vmem:[#allocation2 + $0x2f0] sm:$0xff] %v927
      %v938 = vld [vmem:[%s197 + $0x8] sm:$0xff]
      %v939 = vld [vmem:[%s197 + $0x10] sm:$0xff]
      %v940 = vld [vmem:[%s197 + $0x18] sm:$0xff]
      %v941 = vld [vmem:[%s197 + $0x20] sm:$0xff]
      %v942 = vld [vmem:[%s197 + $0x28] sm:$0xff]
      %v943 = vld [vmem:[%s197 + $0x30] sm:$0xff]
      %950 = vrot.lane.b32.xlu0 %v938, 14
      %v951 = vpop.permute.xlu0 %950
      %952 = vrot.lane.b32.xlu0 %v939, 14
      %v953 = vpop.permute.xlu0 %952
      %954 = vrot.lane.b32.xlu0 %v940, 14
      %v955 = vpop.permute.xlu0 %954
      %956 = vrot.lane.b32.xlu0 %v941, 14
      %v957 = vpop.permute.xlu0 %956
      %958 = vrot.lane.b32.xlu0 %v942, 14
      %v959 = vpop.permute.xlu0 %958
      %960 = vrot.lane.b32.xlu0 %v943, 14
      %v961 = vpop.permute.xlu0 %960
      %vm962 = vcmask 113664
      %v963 = vsel %vm962, %v951, %v953
      %v964 = vsel %vm962, %v953, %v955
      %v965 = vsel %vm962, %v955, %v957
      %v966 = vsel %vm962, %v957, %v959
      %v967 = vsel %vm962, %v959, %v961
      %973 = vst [vmem:[#allocation2 + $0x2f8] sm:$0xff] %v963
      %974 = vst [vmem:[#allocation2 + $0x300] sm:$0xff] %v964
      %975 = vst [vmem:[#allocation2 + $0x308] sm:$0xff] %v965
      %976 = vst [vmem:[#allocation2 + $0x310] sm:$0xff] %v966
      %977 = vst [vmem:[#allocation2 + $0x318] sm:$0xff] %v967
      %v978 = vld [vmem:[%s197 + $0x8] sm:$0xff]
      %v979 = vld [vmem:[%s197 + $0x10] sm:$0xff]
      %v980 = vld [vmem:[%s197 + $0x18] sm:$0xff]
      %v981 = vld [vmem:[%s197 + $0x20] sm:$0xff]
      %v982 = vld [vmem:[%s197 + $0x28] sm:$0xff]
      %v983 = vld [vmem:[%s197 + $0x30] sm:$0xff]
      %990 = vrot.lane.b32.xlu0 %v978, 123
      %v991 = vpop.permute.xlu0 %990
      %992 = vrot.lane.b32.xlu0 %v979, 123
      %v993 = vpop.permute.xlu0 %992
      %994 = vrot.lane.b32.xlu0 %v980, 123
      %v995 = vpop.permute.xlu0 %994
      %996 = vrot.lane.b32.xlu0 %v981, 123
      %v997 = vpop.permute.xlu0 %996
      %998 = vrot.lane.b32.xlu0 %v982, 123
      %v999 = vpop.permute.xlu0 %998
      %1000 = vrot.lane.b32.xlu0 %v983, 123
      %v1001 = vpop.permute.xlu0 %1000
      %vm1002 = vcmask 1006592
      %v1003 = vsel %vm1002, %v991, %v993
      %v1004 = vsel %vm1002, %v993, %v995
      %v1005 = vsel %vm1002, %v995, %v997
      %v1006 = vsel %vm1002, %v997, %v999
      %v1007 = vsel %vm1002, %v999, %v1001
      %1013 = vst [vmem:[#allocation2 + $0x320] sm:$0xff] %v1003
      %1014 = vst [vmem:[#allocation2 + $0x328] sm:$0xff] %v1004
      %1015 = vst [vmem:[#allocation2 + $0x330] sm:$0xff] %v1005
      %1016 = vst [vmem:[#allocation2 + $0x338] sm:$0xff] %v1006
      %1017 = vst [vmem:[#allocation2 + $0x340] sm:$0xff] %v1007
      %v1018 = vld [vmem:[%s197 + $0x8] sm:$0xff]
      %v1019 = vld [vmem:[%s197 + $0x10] sm:$0xff]
      %v1020 = vld [vmem:[%s197 + $0x18] sm:$0xff]
      %v1021 = vld [vmem:[%s197 + $0x20] sm:$0xff]
      %v1022 = vld [vmem:[%s197 + $0x28] sm:$0xff]
      %v1023 = vld [vmem:[%s197 + $0x30] sm:$0xff]
      %1030 = vrot.lane.b32.xlu0 %v1018, 124
      %v1031 = vpop.permute.xlu0 %1030
      %1032 = vrot.lane.b32.xlu0 %v1019, 124
      %v1033 = vpop.permute.xlu0 %1032
      %1034 = vrot.lane.b32.xlu0 %v1020, 124
      %v1035 = vpop.permute.xlu0 %1034
      %1036 = vrot.lane.b32.xlu0 %v1021, 124
      %v1037 = vpop.permute.xlu0 %1036
      %1038 = vrot.lane.b32.xlu0 %v1022, 124
      %v1039 = vpop.permute.xlu0 %1038
      %1040 = vrot.lane.b32.xlu0 %v1023, 124
      %v1041 = vpop.permute.xlu0 %1040
      %vm1042 = vcmask 1014784
      %v1043 = vsel %vm1042, %v1031, %v1033
      %v1044 = vsel %vm1042, %v1033, %v1035
      %v1045 = vsel %vm1042, %v1035, %v1037
      %v1046 = vsel %vm1042, %v1037, %v1039
      %v1047 = vsel %vm1042, %v1039, %v1041
      %1053 = vst [vmem:[#allocation2 + $0x348] sm:$0xff] %v1043
      %1054 = vst [vmem:[#allocation2 + $0x350] sm:$0xff] %v1044
      %1055 = vst [vmem:[#allocation2 + $0x358] sm:$0xff] %v1045
      %1056 = vst [vmem:[#allocation2 + $0x360] sm:$0xff] %v1046
      %1057 = vst [vmem:[#allocation2 + $0x368] sm:$0xff] %v1047
      %v1058 = vld [vmem:[%s197] sm:$0xff]
      %v1059 = vld [vmem:[%s197 + $0x8] sm:$0xff]
      %v1060 = vld [vmem:[%s197 + $0x10] sm:$0xff]
      %v1061 = vld [vmem:[%s197 + $0x18] sm:$0xff]
      %v1062 = vld [vmem:[%s197 + $0x20] sm:$0xff]
      %v1063 = vld [vmem:[%s197 + $0x28] sm:$0xff]
      %1070 = vrot.lane.b32.xlu0 %v1058, 105
      %v1071 = vpop.permute.xlu0 %1070
      %1072 = vrot.lane.b32.xlu0 %v1059, 105
      %v1073 = vpop.permute.xlu0 %1072
      %1074 = vrot.lane.b32.xlu0 %v1060, 105
      %v1075 = vpop.permute.xlu0 %1074
      %1076 = vrot.lane.b32.xlu0 %v1061, 105
      %v1077 = vpop.permute.xlu0 %1076
      %1078 = vrot.lane.b32.xlu0 %v1062, 105
      %v1079 = vpop.permute.xlu0 %1078
      %1080 = vrot.lane.b32.xlu0 %v1063, 105
      %v1081 = vpop.permute.xlu0 %1080
      %vm1082 = vcmask 859136
      %v1083 = vsel %vm1082, %v1071, %v1073
      %v1084 = vsel %vm1082, %v1073, %v1075
      %v1085 = vsel %vm1082, %v1075, %v1077
      %v1086 = vsel %vm1082, %v1077, %v1079
      %v1087 = vsel %vm1082, %v1079, %v1081
      %1093 = vst [vmem:[#allocation2 + $0x370] sm:$0xff] %v1083
      %1094 = vst [vmem:[#allocation2 + $0x378] sm:$0xff] %v1084
      %1095 = vst [vmem:[#allocation2 + $0x380] sm:$0xff] %v1085
      %1096 = vst [vmem:[#allocation2 + $0x388] sm:$0xff] %v1086
      %1097 = vst [vmem:[#allocation2 + $0x390] sm:$0xff] %v1087
      %v1098 = vld [vmem:[%s197] sm:$0xff]
      %v1099 = vld [vmem:[%s197 + $0x8] sm:$0xff]
      %v1100 = vld [vmem:[%s197 + $0x10] sm:$0xff]
      %v1101 = vld [vmem:[%s197 + $0x18] sm:$0xff]
      %v1102 = vld [vmem:[%s197 + $0x20] sm:$0xff]
      %v1103 = vld [vmem:[%s197 + $0x28] sm:$0xff]
      %1110 = vrot.lane.b32.xlu0 %v1098, 106
      %v1111 = vpop.permute.xlu0 %1110
      %1112 = vrot.lane.b32.xlu0 %v1099, 106
      %v1113 = vpop.permute.xlu0 %1112
      %1114 = vrot.lane.b32.xlu0 %v1100, 106
      %v1115 = vpop.permute.xlu0 %1114
      %1116 = vrot.lane.b32.xlu0 %v1101, 106
      %v1117 = vpop.permute.xlu0 %1116
      %1118 = vrot.lane.b32.xlu0 %v1102, 106
      %v1119 = vpop.permute.xlu0 %1118
      %1120 = vrot.lane.b32.xlu0 %v1103, 106
      %v1121 = vpop.permute.xlu0 %1120
      %vm1122 = vcmask 867328
      %v1123 = vsel %vm1122, %v1111, %v1113
      %v1124 = vsel %vm1122, %v1113, %v1115
      %v1125 = vsel %vm1122, %v1115, %v1117
      %v1126 = vsel %vm1122, %v1117, %v1119
      %v1127 = vsel %vm1122, %v1119, %v1121
      %1133 = vst [vmem:[#allocation2 + $0x398] sm:$0xff] %v1123
      %1134 = vst [vmem:[#allocation2 + $0x3a0] sm:$0xff] %v1124
      %1135 = vst [vmem:[#allocation2 + $0x3a8] sm:$0xff] %v1125
      %1136 = vst [vmem:[#allocation2 + $0x3b0] sm:$0xff] %v1126
      %1137 = vst [vmem:[#allocation2 + $0x3b8] sm:$0xff] %v1127
      %v1138 = vld [vmem:[%s197 + $0x8] sm:$0xff]
      %v1139 = vld [vmem:[%s197 + $0x10] sm:$0xff]
      %v1140 = vld [vmem:[%s197 + $0x18] sm:$0xff]
      %v1141 = vld [vmem:[%s197 + $0x20] sm:$0xff]
      %v1142 = vld [vmem:[%s197 + $0x28] sm:$0xff]
      %v1143 = vld [vmem:[%s197 + $0x30] sm:$0xff]
      %1150 = vrot.lane.b32.xlu0 %v1138, 12
      %v1151 = vpop.permute.xlu0 %1150
      %1152 = vrot.lane.b32.xlu0 %v1139, 12
      %v1153 = vpop.permute.xlu0 %1152
      %1154 = vrot.lane.b32.xlu0 %v1140, 12
      %v1155 = vpop.permute.xlu0 %1154
      %1156 = vrot.lane.b32.xlu0 %v1141, 12
      %v1157 = vpop.permute.xlu0 %1156
      %1158 = vrot.lane.b32.xlu0 %v1142, 12
      %v1159 = vpop.permute.xlu0 %1158
      %1160 = vrot.lane.b32.xlu0 %v1143, 12
      %v1161 = vpop.permute.xlu0 %1160
      %vm1162 = vcmask 97280
      %v1163 = vsel %vm1162, %v1151, %v1153
      %v1164 = vsel %vm1162, %v1153, %v1155
      %v1165 = vsel %vm1162, %v1155, %v1157
      %v1166 = vsel %vm1162, %v1157, %v1159
      %v1167 = vsel %vm1162, %v1159, %v1161
      %1173 = vst [vmem:[#allocation2 + $0x3c0] sm:$0xff] %v1163
      %1174 = vst [vmem:[#allocation2 + $0x3c8] sm:$0xff] %v1164
      %1175 = vst [vmem:[#allocation2 + $0x3d0] sm:$0xff] %v1165
      %1176 = vst [vmem:[#allocation2 + $0x3d8] sm:$0xff] %v1166
      %1177 = vst [vmem:[#allocation2 + $0x3e0] sm:$0xff] %v1167
      %v1178 = vld [vmem:[%s197 + $0x8] sm:$0xff]
      %v1179 = vld [vmem:[%s197 + $0x10] sm:$0xff]
      %v1180 = vld [vmem:[%s197 + $0x18] sm:$0xff]
      %v1181 = vld [vmem:[%s197 + $0x20] sm:$0xff]
      %v1182 = vld [vmem:[%s197 + $0x28] sm:$0xff]
      %v1183 = vld [vmem:[%s197 + $0x30] sm:$0xff]
      %1190 = vrot.lane.b32.xlu0 %v1178, 122
      %v1191 = vpop.permute.xlu0 %1190
      %1192 = vrot.lane.b32.xlu0 %v1179, 122
      %v1193 = vpop.permute.xlu0 %1192
      %1194 = vrot.lane.b32.xlu0 %v1180, 122
      %v1195 = vpop.permute.xlu0 %1194
      %1196 = vrot.lane.b32.xlu0 %v1181, 122
      %v1197 = vpop.permute.xlu0 %1196
      %1198 = vrot.lane.b32.xlu0 %v1182, 122
      %v1199 = vpop.permute.xlu0 %1198
      %1200 = vrot.lane.b32.xlu0 %v1183, 122
      %v1201 = vpop.permute.xlu0 %1200
      %vm1202 = vcmask 998400
      %v1203 = vsel %vm1202, %v1191, %v1193
      %v1204 = vsel %vm1202, %v1193, %v1195
      %v1205 = vsel %vm1202, %v1195, %v1197
      %v1206 = vsel %vm1202, %v1197, %v1199
      %v1207 = vsel %vm1202, %v1199, %v1201
      %1213 = vst [vmem:[#allocation2 + $0x3e8] sm:$0xff] %v1203
      %1214 = vst [vmem:[#allocation2 + $0x3f0] sm:$0xff] %v1204
      %1215 = vst [vmem:[#allocation2 + $0x3f8] sm:$0xff] %v1205
      %1216 = vst [vmem:[#allocation2 + $0x400] sm:$0xff] %v1206
      %1217 = vst [vmem:[#allocation2 + $0x408] sm:$0xff] %v1207
      %v1218 = vld [vmem:[%s197] sm:$0xff]
      %v1219 = vld [vmem:[%s197 + $0x8] sm:$0xff]
      %v1220 = vld [vmem:[%s197 + $0x10] sm:$0xff]
      %v1221 = vld [vmem:[%s197 + $0x18] sm:$0xff]
      %v1222 = vld [vmem:[%s197 + $0x20] sm:$0xff]
      %v1223 = vld [vmem:[%s197 + $0x28] sm:$0xff]
      %1230 = vrot.lane.b32.xlu0 %v1218, 104
      %v1231 = vpop.permute.xlu0 %1230
      %1232 = vrot.lane.b32.xlu0 %v1219, 104
      %v1233 = vpop.permute.xlu0 %1232
      %1234 = vrot.lane.b32.xlu0 %v1220, 104
      %v1235 = vpop.permute.xlu0 %1234
      %1236 = vrot.lane.b32.xlu0 %v1221, 104
      %v1237 = vpop.permute.xlu0 %1236
      %1238 = vrot.lane.b32.xlu0 %v1222, 104
      %v1239 = vpop.permute.xlu0 %1238
      %1240 = vrot.lane.b32.xlu0 %v1223, 104
      %v1241 = vpop.permute.xlu0 %1240
      %vm1242 = vcmask 850944
      %v1243 = vsel %vm1242, %v1231, %v1233
      %v1244 = vsel %vm1242, %v1233, %v1235
      %v1245 = vsel %vm1242, %v1235, %v1237
      %v1246 = vsel %vm1242, %v1237, %v1239
      %v1247 = vsel %vm1242, %v1239, %v1241
      %1253 = vst [vmem:[#allocation2 + $0x410] sm:$0xff] %v1243
      %1254 = vst [vmem:[#allocation2 + $0x418] sm:$0xff] %v1244
      %1255 = vst [vmem:[#allocation2 + $0x420] sm:$0xff] %v1245
      %1256 = vst [vmem:[#allocation2 + $0x428] sm:$0xff] %v1246
      %1257 = vst [vmem:[#allocation2 + $0x430] sm:$0xff] %v1247
      %v1258 = vld [vmem:[%s1] sm:$0xff]
      %v1259 = vld [vmem:[%s1 + $0x8] sm:$0xff]
      %v1260 = vld [vmem:[%s1 + $0x10] sm:$0xff]
      %v1261 = vld [vmem:[%s1 + $0x18] sm:$0xff]
      %v1262 = vld [vmem:[%s1 + $0x20] sm:$0xff]
      %v1263 = vld [vmem:[%s1 + $0x28] sm:$0xff]
      %v1264 = vld [vmem:[%s1 + $0x30] sm:$0xff]
      %v1265 = vld [vmem:[%s1 + $0x38] sm:$0xff]
      %v1266 = vld [vmem:[#allocation2] sm:$0xff]
      %v1267 = vld [vmem:[#allocation2 + $0x8] sm:$0xff]
      %v1268 = vld [vmem:[#allocation2 + $0x10] sm:$0xff]
      %v1269 = vld [vmem:[#allocation2 + $0x18] sm:$0xff]
      %v1270 = vld [vmem:[#allocation2 + $0x20] sm:$0xff]
      %v1271 = vld [vmem:[#allocation2 + $0x28] sm:$0xff]
      %v1272 = vld [vmem:[#allocation2 + $0x30] sm:$0xff]
      %v1273 = vld [vmem:[#allocation2 + $0x38] sm:$0xff]
      %v1274 = vld [vmem:[#allocation2 + $0x40] sm:$0xff]
      %v1275 = vld [vmem:[#allocation2 + $0x48] sm:$0xff]
      %v1276 = vld [vmem:[#allocation2 + $0x50] sm:$0xff]
      %v1277 = vld [vmem:[#allocation2 + $0x58] sm:$0xff]
      %v1278 = vld [vmem:[#allocation2 + $0x60] sm:$0xff]
      %v1279 = vld [vmem:[#allocation2 + $0x68] sm:$0xff]
      %v1280 = vld [vmem:[#allocation2 + $0x70] sm:$0xff]
      %v1281 = vld [vmem:[#allocation2 + $0x78] sm:$0xff]
      %v1282 = vld [vmem:[#allocation2 + $0x80] sm:$0xff]
      %v1283 = vld [vmem:[#allocation2 + $0x88] sm:$0xff]
      %v1284 = vld [vmem:[#allocation2 + $0x90] sm:$0xff]
      %v1285 = vld [vmem:[#allocation2 + $0x98] sm:$0xff]
      %v1286 = vld [vmem:[#allocation2 + $0xa0] sm:$0xff]
      %v1287 = vld [vmem:[#allocation2 + $0xa8] sm:$0xff]
      %v1288 = vld [vmem:[#allocation2 + $0xb0] sm:$0xff]
      %v1289 = vld [vmem:[#allocation2 + $0xb8] sm:$0xff]
      %v1290 = vld [vmem:[#allocation2 + $0xc0] sm:$0xff]
      %v1291 = vld [vmem:[#allocation2 + $0xc8] sm:$0xff]
      %v1292 = vld [vmem:[#allocation2 + $0xd0] sm:$0xff]
      %v1293 = vld [vmem:[#allocation2 + $0xd8] sm:$0xff]
      %v1294 = vld [vmem:[#allocation2 + $0xe0] sm:$0xff]
      %v1295 = vld [vmem:[#allocation2 + $0xe8] sm:$0xff]
      %v1296 = vld [vmem:[#allocation2 + $0xf0] sm:$0xff]
      %v1297 = vld [vmem:[#allocation2 + $0xf8] sm:$0xff]
      %v1298 = vld [vmem:[#allocation2 + $0x100] sm:$0xff]
      %v1299 = vld [vmem:[#allocation2 + $0x108] sm:$0xff]
      %v1300 = vld [vmem:[#allocation2 + $0x110] sm:$0xff]
      %v1301 = vld [vmem:[#allocation2 + $0x118] sm:$0xff]
      %v1302 = vld [vmem:[#allocation2 + $0x120] sm:$0xff]
      %v1303 = vld [vmem:[#allocation2 + $0x128] sm:$0xff]
      %v1304 = vld [vmem:[#allocation2 + $0x130] sm:$0xff]
      %v1305 = vld [vmem:[#allocation2 + $0x138] sm:$0xff]
      %v1306 = vld [vmem:[#allocation2 + $0x140] sm:$0xff]
      %v1307 = vld [vmem:[#allocation2 + $0x148] sm:$0xff]
      %v1308 = vld [vmem:[#allocation2 + $0x150] sm:$0xff]
      %v1309 = vld [vmem:[#allocation2 + $0x158] sm:$0xff]
      %v1310 = vld [vmem:[#allocation2 + $0x160] sm:$0xff]
      %v1311 = vld [vmem:[#allocation2 + $0x168] sm:$0xff]
      %v1312 = vld [vmem:[#allocation2 + $0x170] sm:$0xff]
      %v1313 = vld [vmem:[#allocation2 + $0x178] sm:$0xff]
      %v1314 = vld [vmem:[#allocation2 + $0x180] sm:$0xff]
      %v1315 = vld [vmem:[#allocation2 + $0x188] sm:$0xff]
      %v1316 = vld [vmem:[#allocation2 + $0x190] sm:$0xff]
      %v1317 = vld [vmem:[#allocation2 + $0x198] sm:$0xff]
      %v1318 = vld [vmem:[#allocation2 + $0x1a0] sm:$0xff]
      %v1319 = vld [vmem:[#allocation2 + $0x1a8] sm:$0xff]
      %v1320 = vld [vmem:[#allocation2 + $0x1b0] sm:$0xff]
      %v1321 = vld [vmem:[#allocation2 + $0x1b8] sm:$0xff]
      %v1322 = vld [vmem:[#allocation2 + $0x1c0] sm:$0xff]
      %v1323 = vld [vmem:[#allocation2 + $0x1c8] sm:$0xff]
      %v1324 = vld [vmem:[#allocation2 + $0x1d0] sm:$0xff]
      %v1325 = vld [vmem:[#allocation2 + $0x1d8] sm:$0xff]
      %v1326 = vld [vmem:[#allocation2 + $0x1e0] sm:$0xff]
      %v1327 = vld [vmem:[#allocation2 + $0x1e8] sm:$0xff]
      %v1328 = vld [vmem:[#allocation2 + $0x1f0] sm:$0xff]
      %v1329 = vld [vmem:[#allocation2 + $0x1f8] sm:$0xff]
      %v1330 = vld [vmem:[#allocation2 + $0x200] sm:$0xff]
      %v1331 = vld [vmem:[#allocation2 + $0x208] sm:$0xff]
      %v1332 = vld [vmem:[#allocation2 + $0x210] sm:$0xff]
      %v1333 = vld [vmem:[#allocation2 + $0x218] sm:$0xff]
      %v1334 = vld [vmem:[#allocation2 + $0x220] sm:$0xff]
      %v1335 = vld [vmem:[#allocation2 + $0x228] sm:$0xff]
      %v1336 = vld [vmem:[#allocation2 + $0x230] sm:$0xff]
      %v1337 = vld [vmem:[#allocation2 + $0x238] sm:$0xff]
      %v1338 = vld [vmem:[#allocation2 + $0x240] sm:$0xff]
      %v1339 = vld [vmem:[#allocation2 + $0x248] sm:$0xff]
      %v1340 = vld [vmem:[#allocation2 + $0x250] sm:$0xff]
      %v1341 = vld [vmem:[#allocation2 + $0x258] sm:$0xff]
      %v1342 = vld [vmem:[#allocation2 + $0x260] sm:$0xff]
      %v1343 = vld [vmem:[#allocation2 + $0x268] sm:$0xff]
      %v1344 = vld [vmem:[#allocation2 + $0x270] sm:$0xff]
      %v1345 = vld [vmem:[#allocation2 + $0x278] sm:$0xff]
      %v1346 = vld [vmem:[#allocation2 + $0x280] sm:$0xff]
      %v1347 = vld [vmem:[#allocation2 + $0x288] sm:$0xff]
      %v1348 = vld [vmem:[#allocation2 + $0x290] sm:$0xff]
      %v1349 = vld [vmem:[#allocation2 + $0x298] sm:$0xff]
      %v1350 = vld [vmem:[#allocation2 + $0x2a0] sm:$0xff]
      %v1351 = vld [vmem:[#allocation2 + $0x2a8] sm:$0xff]
      %v1352 = vld [vmem:[#allocation2 + $0x2b0] sm:$0xff]
      %v1353 = vld [vmem:[#allocation2 + $0x2b8] sm:$0xff]
      %v1354 = vld [vmem:[#allocation2 + $0x2c0] sm:$0xff]
      %v1355 = vld [vmem:[#allocation2 + $0x2c8] sm:$0xff]
      %v1356 = vld [vmem:[#allocation2 + $0x2d0] sm:$0xff]
      %v1357 = vld [vmem:[#allocation2 + $0x2d8] sm:$0xff]
      %v1358 = vld [vmem:[#allocation2 + $0x2e0] sm:$0xff]
      %v1359 = vld [vmem:[#allocation2 + $0x2e8] sm:$0xff]
      %v1360 = vld [vmem:[#allocation2 + $0x2f0] sm:$0xff]
      %v1361 = vld [vmem:[#allocation2 + $0x2f8] sm:$0xff]
      %v1362 = vld [vmem:[#allocation2 + $0x300] sm:$0xff]
      %v1363 = vld [vmem:[#allocation2 + $0x308] sm:$0xff]
      %v1364 = vld [vmem:[#allocation2 + $0x310] sm:$0xff]
      %v1365 = vld [vmem:[#allocation2 + $0x318] sm:$0xff]
      %v1366 = vld [vmem:[#allocation2 + $0x320] sm:$0xff]
      %v1367 = vld [vmem:[#allocation2 + $0x328] sm:$0xff]
      %v1368 = vld [vmem:[#allocation2 + $0x330] sm:$0xff]
      %v1369 = vld [vmem:[#allocation2 + $0x338] sm:$0xff]
      %v1370 = vld [vmem:[#allocation2 + $0x340] sm:$0xff]
      %v1371 = vld [vmem:[#allocation2 + $0x348] sm:$0xff]
      %v1372 = vld [vmem:[#allocation2 + $0x350] sm:$0xff]
      %v1373 = vld [vmem:[#allocation2 + $0x358] sm:$0xff]
      %v1374 = vld [vmem:[#allocation2 + $0x360] sm:$0xff]
      %v1375 = vld [vmem:[#allocation2 + $0x368] sm:$0xff]
      %v1376 = vld [vmem:[#allocation2 + $0x370] sm:$0xff]
      %v1377 = vld [vmem:[#allocation2 + $0x378] sm:$0xff]
      %v1378 = vld [vmem:[#allocation2 + $0x380] sm:$0xff]
      %v1379 = vld [vmem:[#allocation2 + $0x388] sm:$0xff]
      %v1380 = vld [vmem:[#allocation2 + $0x390] sm:$0xff]
      %v1381 = vld [vmem:[#allocation2 + $0x398] sm:$0xff]
      %v1382 = vld [vmem:[#allocation2 + $0x3a0] sm:$0xff]
      %v1383 = vld [vmem:[#allocation2 + $0x3a8] sm:$0xff]
      %v1384 = vld [vmem:[#allocation2 + $0x3b0] sm:$0xff]
      %v1385 = vld [vmem:[#allocation2 + $0x3b8] sm:$0xff]
      %v1386 = vld [vmem:[#allocation2 + $0x3c0] sm:$0xff]
      %v1387 = vld [vmem:[#allocation2 + $0x3c8] sm:$0xff]
      %v1388 = vld [vmem:[#allocation2 + $0x3d0] sm:$0xff]
      %v1389 = vld [vmem:[#allocation2 + $0x3d8] sm:$0xff]
      %v1390 = vld [vmem:[#allocation2 + $0x3e0] sm:$0xff]
      %v1391 = vld [vmem:[#allocation2 + $0x3e8] sm:$0xff]
      %v1392 = vld [vmem:[#allocation2 + $0x3f0] sm:$0xff]
      %v1393 = vld [vmem:[#allocation2 + $0x3f8] sm:$0xff]
      %v1394 = vld [vmem:[#allocation2 + $0x400] sm:$0xff]
      %v1395 = vld [vmem:[#allocation2 + $0x408] sm:$0xff]
      %v1396 = vld [vmem:[#allocation2 + $0x410] sm:$0xff]
      %v1397 = vld [vmem:[#allocation2 + $0x418] sm:$0xff]
      %v1398 = vld [vmem:[#allocation2 + $0x420] sm:$0xff]
      %v1399 = vld [vmem:[#allocation2 + $0x428] sm:$0xff]
      %v1400 = vld [vmem:[#allocation2 + $0x430] sm:$0xff]
      %v1401 = vld [vmem:[%s2] sm:$0xff]
      %v1402 = vld [vmem:[%s2 + $0x8] sm:$0xff]
      %v1403 = vld [vmem:[%s2 + $0x10] sm:$0xff]
      %v1404 = vld [vmem:[%s2 + $0x18] sm:$0xff]
      %1406 = vset.pattern.permute.xlu0 0
      %1407 = vperm.xlu0 %1406, %v1401
      %v1408 = vpop.permute.xlu0 %1407
      %1411 = vset.pattern.permute.xlu0 0
      %1412 = vperm.xlu0 %1411, %v1402
      %v1413 = vpop.permute.xlu0 %1412
      %1416 = vset.pattern.permute.xlu0 0
      %1417 = vperm.xlu0 %1416, %v1403
      %v1418 = vpop.permute.xlu0 %1417
      %1421 = vset.pattern.permute.xlu0 0
      %1422 = vperm.xlu0 %1421, %v1404
      %v1423 = vpop.permute.xlu0 %1422
      %vm1425 = vcmask 719872
      %v1427 = vsel %vm1425, %v1259, 0
      %v1430 = vsel %vm1425, %v1261, 0
      %v1433 = vsel %vm1425, %v1263, 0
      %v1436 = vsel %vm1425, %v1265, 0
      %1438 = vmatprep.subr.mxu0 %v1267
      %1439 = vmatpush1.msra.mxu0 %v1266
      %1440 = vmatprep.subr.mxu0 %v1272
      %1441 = vmatpush1.msra.mxu0 %v1271
      %1442 = vmatprep.subr.mxu0 %v1277
      %1443 = vmatpush1.msra.mxu0 %v1276
      %1444 = vmatprep.subr.mxu0 %v1282
      %1445 = vmatpush1.msra.mxu0 %v1281
      %1446 = vmatprep.subr.mxu0 %v1287
      %1447 = vmatpush1.msra.mxu0 %v1286
      %1448 = vmatprep.subr.mxu0 %v1292
      %1449 = vmatpush1.msra.mxu0 %v1291
      %1450 = vmatprep.subr.mxu0 %v1297
      %1451 = vmatpush1.msra.mxu0 %v1296
      %1452 = vmatprep.subr.mxu0 %v1302
      %1453 = vmatpush1.msra.mxu0 %v1301
      %1454 = vmatprep.subr.mxu0 %v1307
      %1455 = vmatpush1.msra.mxu0 %v1306
      %1456 = vmatprep.subr.mxu0 %v1312
      %1457 = vmatpush1.msra.mxu0 %v1311
      %1458 = vmatprep.subr.mxu0 %v1317
      %1459 = vmatpush1.msra.mxu0 %v1316
      %1460 = vmatprep.subr.mxu0 %v1322
      %1461 = vmatpush1.msra.mxu0 %v1321
      %1462 = vmatprep.subr.mxu0 %v1327
      %1463 = vmatpush1.msra.mxu0 %v1326
      %1464 = vmatprep.subr.mxu0 %v1332
      %1465 = vmatpush1.msra.mxu0 %v1331
      %1466 = vmatprep.subr.mxu0 %v1337
      %1467 = vmatpush1.msra.mxu0 %v1336
      %1468 = vmatprep.subr.mxu0 %v1342
      %1469 = vmatpush1.msra.mxu0 %v1341
      %1470 = vmatprep.subr.mxu0 %v1347
      %1471 = vmatpush1.msra.mxu0 %v1346
      %1472 = vmatprep.subr.mxu0 %v1352
      %1473 = vmatpush1.msra.mxu0 %v1351
      %1474 = vmatprep.subr.mxu0 %v1357
      %1475 = vmatpush1.msra.mxu0 %v1356
      %1476 = vmatprep.subr.mxu0 %v1362
      %1477 = vmatpush1.msra.mxu0 %v1361
      %1478 = vmatprep.subr.mxu0 %v1367
      %1479 = vmatpush1.msra.mxu0 %v1366
      %1480 = vmatprep.subr.mxu0 %v1372
      %1481 = vmatpush1.msra.mxu0 %v1371
      %1482 = vmatprep.subr.mxu0 %v1377
      %1483 = vmatpush1.msra.mxu0 %v1376
      %1484 = vmatprep.subr.mxu0 %v1382
      %1485 = vmatpush1.msra.mxu0 %v1381
      %1486 = vmatprep.subr.mxu0 %v1387
      %1487 = vmatpush1.msra.mxu0 %v1386
      %1488 = vmatprep.subr.mxu0 %v1392
      %1489 = vmatpush1.msra.mxu0 %v1391
      %1490 = vmatprep.subr.mxu0 %v1397
      %1491 = vmatpush1.msra.mxu0 %v1396
      %1492 = vmatprep.subr.mxu0 0.0
      %1493 = vmatpush1.msra.mxu0 0.0
      %1494 = vmatprep.subr.mxu0 0.0
      %1495 = vmatpush1.msra.mxu0 0.0
      %1496 = vmatprep.subr.mxu0 0.0
      %1497 = vmatpush1.msra.mxu0 0.0
      %1498 = vmatprep.subr.mxu0 0.0
      %1499 = vmatpush1.msra.mxu0 0.0
      %1500 = vmatprep.subr.mxu0 0.0
      %1501 = vmatpush1.msra.mxu0 0.0
      %1502 = vmatprep.mubr.f32.mxu0 %v1427
      %1503 = vmatmul.mubr.f32.gmra.mrb[0].mxu0 %v1258
      %v1504 = vpop.f32.mrb[0].mxu0
      %v1505 = vadd.f32 %v1408, %v1504
      %v1506 = vpop.f32.mrb[0].mxu0
      %v1507 = vadd.f32 %v1408, %v1506
      %1508 = vmatprep.mubr.f32.mxu0 %v1430
      %1509 = vmatmul.mubr.f32.gmra.mrb[0].mxu0 %v1260
      %v1510 = vpop.f32.mrb[0].mxu0
      %v1511 = vadd.f32 %v1413, %v1510
      %v1512 = vpop.f32.mrb[0].mxu0
      %v1513 = vadd.f32 %v1413, %v1512
      %1514 = vmatprep.mubr.f32.mxu0 %v1433
      %1515 = vmatmul.mubr.f32.gmra.mrb[0].mxu0 %v1262
      %v1516 = vpop.f32.mrb[0].mxu0
      %v1517 = vadd.f32 %v1418, %v1516
      %v1518 = vpop.f32.mrb[0].mxu0
      %v1519 = vadd.f32 %v1418, %v1518
      %1520 = vmatprep.mubr.f32.mxu0 %v1436
      %1521 = vmatmul.mubr.f32.gmra.mrb[0].mxu0 %v1264
      %v1522 = vpop.f32.mrb[0].mxu0
      %v1523 = vadd.f32 %v1423, %v1522
      %v1524 = vpop.f32.mrb[0].mxu0
      %v1525 = vadd.f32 %v1423, %v1524
      %1526 = vdwg.mxu0
      %1527 = vmatprep.subr.mxu0 %v1269
      %1528 = vmatpush1.msra.mxu0 %v1268
      %1529 = vmatprep.subr.mxu0 %v1274
      %1530 = vmatpush1.msra.mxu0 %v1273
      %1531 = vmatprep.subr.mxu0 %v1279
      %1532 = vmatpush1.msra.mxu0 %v1278
      %1533 = vmatprep.subr.mxu0 %v1284
      %1534 = vmatpush1.msra.mxu0 %v1283
      %1535 = vmatprep.subr.mxu0 %v1289
      %1536 = vmatpush1.msra.mxu0 %v1288
      %1537 = vmatprep.subr.mxu0 %v1294
      %1538 = vmatpush1.msra.mxu0 %v1293
      %1539 = vmatprep.subr.mxu0 %v1299
      %1540 = vmatpush1.msra.mxu0 %v1298
      %1541 = vmatprep.subr.mxu0 %v1304
      %1542 = vmatpush1.msra.mxu0 %v1303
      %1543 = vmatprep.subr.mxu0 %v1309
      %1544 = vmatpush1.msra.mxu0 %v1308
      %1545 = vmatprep.subr.mxu0 %v1314
      %1546 = vmatpush1.msra.mxu0 %v1313
      %1547 = vmatprep.subr.mxu0 %v1319
      %1548 = vmatpush1.msra.mxu0 %v1318
      %1549 = vmatprep.subr.mxu0 %v1324
      %1550 = vmatpush1.msra.mxu0 %v1323
      %1551 = vmatprep.subr.mxu0 %v1329
      %1552 = vmatpush1.msra.mxu0 %v1328
      %1553 = vmatprep.subr.mxu0 %v1334
      %1554 = vmatpush1.msra.mxu0 %v1333
      %1555 = vmatprep.subr.mxu0 %v1339
      %1556 = vmatpush1.msra.mxu0 %v1338
      %1557 = vmatprep.subr.mxu0 %v1344
      %1558 = vmatpush1.msra.mxu0 %v1343
      %1559 = vmatprep.subr.mxu0 %v1349
      %1560 = vmatpush1.msra.mxu0 %v1348
      %1561 = vmatprep.subr.mxu0 %v1354
      %1562 = vmatpush1.msra.mxu0 %v1353
      %1563 = vmatprep.subr.mxu0 %v1359
      %1564 = vmatpush1.msra.mxu0 %v1358
      %1565 = vmatprep.subr.mxu0 %v1364
      %1566 = vmatpush1.msra.mxu0 %v1363
      %1567 = vmatprep.subr.mxu0 %v1369
      %1568 = vmatpush1.msra.mxu0 %v1368
      %1569 = vmatprep.subr.mxu0 %v1374
      %1570 = vmatpush1.msra.mxu0 %v1373
      %1571 = vmatprep.subr.mxu0 %v1379
      %1572 = vmatpush1.msra.mxu0 %v1378
      %1573 = vmatprep.subr.mxu0 %v1384
      %1574 = vmatpush1.msra.mxu0 %v1383
      %1575 = vmatprep.subr.mxu0 %v1389
      %1576 = vmatpush1.msra.mxu0 %v1388
      %1577 = vmatprep.subr.mxu0 %v1394
      %1578 = vmatpush1.msra.mxu0 %v1393
      %1579 = vmatprep.subr.mxu0 %v1399
      %1580 = vmatpush1.msra.mxu0 %v1398
      %1581 = vmatprep.subr.mxu0 0.0
      %1582 = vmatpush1.msra.mxu0 0.0
      %1583 = vmatprep.subr.mxu0 0.0
      %1584 = vmatpush1.msra.mxu0 0.0
      %1585 = vmatprep.subr.mxu0 0.0
      %1586 = vmatpush1.msra.mxu0 0.0
      %1587 = vmatprep.subr.mxu0 0.0
      %1588 = vmatpush1.msra.mxu0 0.0
      %1589 = vmatprep.subr.mxu0 0.0
      %1590 = vmatpush1.msra.mxu0 0.0
      %1591 = vmatprep.mubr.f32.mxu0 %v1427
      %1592 = vmatmul.mubr.f32.gmra.mrb[0].mxu0 %v1258
      %v1593 = vpop.f32.mrb[0].mxu0
      %v1594 = vadd.f32 %v1408, %v1593
      %v1595 = vpop.f32.mrb[0].mxu0
      %v1596 = vadd.f32 %v1408, %v1595
      %1597 = vmatprep.mubr.f32.mxu0 %v1430
      %1598 = vmatmul.mubr.f32.gmra.mrb[0].mxu0 %v1260
      %v1599 = vpop.f32.mrb[0].mxu0
      %v1600 = vadd.f32 %v1413, %v1599
      %v1601 = vpop.f32.mrb[0].mxu0
      %v1602 = vadd.f32 %v1413, %v1601
      %1603 = vmatprep.mubr.f32.mxu0 %v1433
      %1604 = vmatmul.mubr.f32.gmra.mrb[0].mxu0 %v1262
      %v1605 = vpop.f32.mrb[0].mxu0
      %v1606 = vadd.f32 %v1418, %v1605
      %v1607 = vpop.f32.mrb[0].mxu0
      %v1608 = vadd.f32 %v1418, %v1607
      %1609 = vmatprep.mubr.f32.mxu0 %v1436
      %1610 = vmatmul.mubr.f32.gmra.mrb[0].mxu0 %v1264
      %v1611 = vpop.f32.mrb[0].mxu0
      %v1612 = vadd.f32 %v1423, %v1611
      %v1613 = vpop.f32.mrb[0].mxu0
      %v1614 = vadd.f32 %v1423, %v1613
      %1615 = vdwg.mxu0
      %1616 = vmatprep.subr.mxu0 0.0
      %1617 = vmatpush1.msra.mxu0 %v1270
      %1618 = vmatprep.subr.mxu0 0.0
      %1619 = vmatpush1.msra.mxu0 %v1275
      %1620 = vmatprep.subr.mxu0 0.0
      %1621 = vmatpush1.msra.mxu0 %v1280
      %1622 = vmatprep.subr.mxu0 0.0
      %1623 = vmatpush1.msra.mxu0 %v1285
      %1624 = vmatprep.subr.mxu0 0.0
      %1625 = vmatpush1.msra.mxu0 %v1290
      %1626 = vmatprep.subr.mxu0 0.0
      %1627 = vmatpush1.msra.mxu0 %v1295
      %1628 = vmatprep.subr.mxu0 0.0
      %1629 = vmatpush1.msra.mxu0 %v1300
      %1630 = vmatprep.subr.mxu0 0.0
      %1631 = vmatpush1.msra.mxu0 %v1305
      %1632 = vmatprep.subr.mxu0 0.0
      %1633 = vmatpush1.msra.mxu0 %v1310
      %1634 = vmatprep.subr.mxu0 0.0
      %1635 = vmatpush1.msra.mxu0 %v1315
      %1636 = vmatprep.subr.mxu0 0.0
      %1637 = vmatpush1.msra.mxu0 %v1320
      %1638 = vmatprep.subr.mxu0 0.0
      %1639 = vmatpush1.msra.mxu0 %v1325
      %1640 = vmatprep.subr.mxu0 0.0
      %1641 = vmatpush1.msra.mxu0 %v1330
      %1642 = vmatprep.subr.mxu0 0.0
      %1643 = vmatpush1.msra.mxu0 %v1335
      %1644 = vmatprep.subr.mxu0 0.0
      %1645 = vmatpush1.msra.mxu0 %v1340
      %1646 = vmatprep.subr.mxu0 0.0
      %1647 = vmatpush1.msra.mxu0 %v1345
      %1648 = vmatprep.subr.mxu0 0.0
      %1649 = vmatpush1.msra.mxu0 %v1350
      %1650 = vmatprep.subr.mxu0 0.0
      %1651 = vmatpush1.msra.mxu0 %v1355
      %1652 = vmatprep.subr.mxu0 0.0
      %1653 = vmatpush1.msra.mxu0 %v1360
      %1654 = vmatprep.subr.mxu0 0.0
      %1655 = vmatpush1.msra.mxu0 %v1365
      %1656 = vmatprep.subr.mxu0 0.0
      %1657 = vmatpush1.msra.mxu0 %v1370
      %1658 = vmatprep.subr.mxu0 0.0
      %1659 = vmatpush1.msra.mxu0 %v1375
      %1660 = vmatprep.subr.mxu0 0.0
      %1661 = vmatpush1.msra.mxu0 %v1380
      %1662 = vmatprep.subr.mxu0 0.0
      %1663 = vmatpush1.msra.mxu0 %v1385
      %1664 = vmatprep.subr.mxu0 0.0
      %1665 = vmatpush1.msra.mxu0 %v1390
      %1666 = vmatprep.subr.mxu0 0.0
      %1667 = vmatpush1.msra.mxu0 %v1395
      %1668 = vmatprep.subr.mxu0 0.0
      %1669 = vmatpush1.msra.mxu0 %v1400
      %1670 = vmatprep.subr.mxu0 0.0
      %1671 = vmatpush1.msra.mxu0 0.0
      %1672 = vmatprep.subr.mxu0 0.0
      %1673 = vmatpush1.msra.mxu0 0.0
      %1674 = vmatprep.subr.mxu0 0.0
      %1675 = vmatpush1.msra.mxu0 0.0
      %1676 = vmatprep.subr.mxu0 0.0
      %1677 = vmatpush1.msra.mxu0 0.0
      %1678 = vmatprep.subr.mxu0 0.0
      %1679 = vmatpush1.msra.mxu0 0.0
      %1680 = vmatprep.mubr.f32.mxu0 %v1427
      %1681 = vmatmul.mubr.f32.gmra.mrb[0].mxu0 %v1258
      %v1682 = vpop.f32.mrb[0].mxu0
      %v1683 = vadd.f32 %v1408, %v1682
      %v1684 = vpop.f32.mrb[0].mxu0
      %1685 = vmatprep.mubr.f32.mxu0 %v1430
      %1686 = vmatmul.mubr.f32.gmra.mrb[0].mxu0 %v1260
      %v1687 = vpop.f32.mrb[0].mxu0
      %v1688 = vadd.f32 %v1413, %v1687
      %v1689 = vpop.f32.mrb[0].mxu0
      %1690 = vmatprep.mubr.f32.mxu0 %v1433
      %1691 = vmatmul.mubr.f32.gmra.mrb[0].mxu0 %v1262
      %v1692 = vpop.f32.mrb[0].mxu0
      %v1693 = vadd.f32 %v1418, %v1692
      %v1694 = vpop.f32.mrb[0].mxu0
      %1695 = vmatprep.mubr.f32.mxu0 %v1436
      %1696 = vmatmul.mubr.f32.gmra.mrb[0].mxu0 %v1264
      %v1697 = vpop.f32.mrb[0].mxu0
      %v1698 = vadd.f32 %v1423, %v1697
      %v1699 = vpop.f32.mrb[0].mxu0
      %1700 = vdwg.mxu0
      %1701 = vst [vmem:[%s206] sm:$0xff] %v1505
      %1702 = vst [vmem:[%s206 + $0x8] sm:$0xff] %v1507
      %1703 = vst [vmem:[%s206 + $0x10] sm:$0xff] %v1594
      %1704 = vst [vmem:[%s206 + $0x18] sm:$0xff] %v1596
      %1705 = vst [vmem:[%s206 + $0x20] sm:$0xff] %v1683
      %1706 = vst [vmem:[%s206 + $0x28] sm:$0xff] %v1511
      %1707 = vst [vmem:[%s206 + $0x30] sm:$0xff] %v1513
      %1708 = vst [vmem:[%s206 + $0x38] sm:$0xff] %v1600
      %1709 = vst [vmem:[%s206 + $0x40] sm:$0xff] %v1602
      %1710 = vst [vmem:[%s206 + $0x48] sm:$0xff] %v1688
      %1711 = vst [vmem:[%s206 + $0x50] sm:$0xff] %v1517
      %1712 = vst [vmem:[%s206 + $0x58] sm:$0xff] %v1519
      %1713 = vst [vmem:[%s206 + $0x60] sm:$0xff] %v1606
      %1714 = vst [vmem:[%s206 + $0x68] sm:$0xff] %v1608
      %1715 = vst [vmem:[%s206 + $0x70] sm:$0xff] %v1693
      %1716 = vst [vmem:[%s206 + $0x78] sm:$0xff] %v1523
      %1717 = vst [vmem:[%s206 + $0x80] sm:$0xff] %v1525
      %1718 = vst [vmem:[%s206 + $0x88] sm:$0xff] %v1612
      %1719 = vst [vmem:[%s206 + $0x90] sm:$0xff] %v1614
      %1720 = vst [vmem:[%s206 + $0x98] sm:$0xff] %v1698
      %s1721 = smul.u32 5, %s19
      %p1722 = scmp.lt.s32.totalorder %s18, 1
      %s1723 = scalar_select %p1722, %s18, 1
      %p1724 = scmp.lt.s32.totalorder %s1721, 4
      %s1725 = scalar_select %p1724, %s1721, 4
      %s1726 = smul.addr %s1723, 20
      %s1727 = sadd.s32 %s1725, %s1726
      %s1728 = smul.addr %s1727, 8
      %s1729 = scalar_lea.vmem %s3, %s1728
      // Predicated region
      $region33: #{conv_transpose3d_pallas.1} parent=31 // pred_check
        %p1730 = pneg %p116
      $region34: #{conv_transpose3d_pallas.1} parent=31 // pred_check_branch
        %1732 = sbr.rel (%p1730) target = $region36
      $region35: #{conv_transpose3d_pallas.1} parent=31 // pred_region
        %s1733 = smul.u32 5, %s19
      $region36: #{conv_transpose3d_pallas.1} parent=31 // pred_fallthru
        _
    $region32: #{conv_transpose3d_pallas.1} parent=5 // pred_fallthru
      _
    %p1734 = scmp.le.s32.totalorder 2, %s9
    // Predicated region
    $region37: #{conv_transpose3d_pallas.1} parent=5 // pred_check
      %p1735 = pneg %p1734
    $region38: #{conv_transpose3d_pallas.1} parent=5 // pred_check_branch
      %1737 = sbr.rel (%p1735) target = $region40
    $region39: #{conv_transpose3d_pallas.1} parent=5 // pred_region
      %s1738 = ssub.s32 %s9, 2
      // Predicated region
      $region41: #{conv_transpose3d_pallas.1} parent=39 // pred_check
        %p1739 = pneg %p122
      $region42: #{conv_transpose3d_pallas.1} parent=39 // pred_check_branch
        %1741 = sbr.rel (%p1739) target = $region44
      $region43: #{conv_transpose3d_pallas.1} parent=39 // pred_region
        %s1742 = smul.u32 5, %s21
        %p1743 = scmp.lt.s32.totalorder %s20, 1
        %s1744 = scalar_select %p1743, %s20, 1
        %p1745 = scmp.lt.s32.totalorder %s1742, 4
        %s1746 = scalar_select %p1745, %s1742, 4
        %s1747 = smul.addr %s1744, 20
        %s1748 = sadd.s32 %s1746, %s1747
        %s1749 = smul.addr %s1748, 8
        %s1750 = scalar_lea.vmem %s3, %s1749
      $region44: #{conv_transpose3d_pallas.1} parent=39 // pred_fallthru
        _
    $region40: #{conv_transpose3d_pallas.1} parent=5 // pred_fallthru
      _
  $region6: #{conv_transpose3d_pallas.1} parent=0 // loop_footer
    %s13 = sadd.s32 1, %s9
  $region7: #{conv_transpose3d_pallas.1} parent=0 // loop_footer_branch
    %8 = sbr.rel target = $region3
  $region8: #{conv_transpose3d_pallas.1} parent=0 // loop_exit
    _

</llo_original>
